<compile_context>
chip_gen: v5e
topology: v5e:2x2
jax: 0.10.0
libtpu: 0.0.40
codegen_flags: <defaults>
</compile_context>

<pallas_src>
import functools

import jax
import jax.numpy as jnp
from jax.experimental import pallas as pl
from jax.experimental.pallas import tpu as pltpu


# ----------------------------------------------------------------------------
# In-kernel helper: 3x3 depthwise conv from a zero-bordered VMEM scratch
# ----------------------------------------------------------------------------
def _dw3x3_from_padded(pad_ref, wd_ref, bd_ref, *, stride, ho, wo):
    """3x3 depthwise conv reading a zero-bordered (h+2, w+2, C) f32 scratch."""
    c = pad_ref.shape[-1]
    wd = wd_ref[...].astype(jnp.float32)                      # (9, C), hoisted
    acc = jnp.zeros((ho, wo, c), jnp.float32) + bd_ref[...].astype(jnp.float32)
    for kh in range(3):
        for kw in range(3):
            if stride == 1:
                patch = pad_ref[pl.ds(kh, ho), pl.ds(kw, wo), :]
            else:
                patch = pad_ref[pl.ds(kh, ho, stride=stride),
                                pl.ds(kw, wo, stride=stride), :]
            acc = acc + patch * wd[kh * 3 + kw, :]
    return acc


# ----------------------------------------------------------------------------
# Fused kernels (NHWC inside; channels on lanes)
# ----------------------------------------------------------------------------
def _branch2_kernel(x_ref, w1_ref, b1_ref, wd_ref, bd_ref, w2_ref, b2_ref,
                    o_ref, pad_ref, *, stride, h, w, ho, wo):
    """Fused pw1(+ReLU) -> dw3x3(+bias) -> pw2(+ReLU) for one batch element.

    Used for benchmodel=1 (channel split folded into zero rows of w1).
    x_ref : (1, h, w, Cin_total)   w1_ref: (Cin_total, Cmid)   b1_ref: (1, Cmid)
    wd_ref: (9, Cmid)              bd_ref: (1, Cmid)
    w2_ref: (Cmid, Cout)           b2_ref: (1, Cout)
    o_ref : (1, ho, wo, Cout)      pad_ref: (h+2, w+2, Cmid) f32 VMEM scratch
    """
    cin = x_ref.shape[-1]
    cmid = w1_ref.shape[-1]

    # Zero the halo border (and interior; interior is overwritten below).
    pad_ref[...] = jnp.zeros_like(pad_ref)

    # 1) 1x1 conv + bias + ReLU (MXU) straight into the scratch interior.
    x2d = x_ref[...].reshape(h * w, cin)
    y1 = jnp.dot(x2d, w1_ref[...], preferred_element_type=jnp.float32)
    y1 = jnp.maximum(y1 + b1_ref[...].astype(jnp.float32), 0.0)
    pad_ref[pl.ds(1, h), pl.ds(1, w), :] = y1.reshape(h, w, cmid)

    # 2) depthwise 3x3 + bias (VPU); halo handled by the zero border.
    acc = _dw3x3_from_padded(pad_ref, wd_ref, bd_ref, stride=stride, ho=ho, wo=wo)

    # 3) 1x1 conv + bias + ReLU (MXU), store.
    y2 = jnp.dot(acc.reshape(ho * wo, cmid), w2_ref[...],
                 preferred_element_type=jnp.float32)
    y2 = jnp.maximum(y2 + b2_ref[...].astype(jnp.float32), 0.0)
    o_ref[...] = y2.reshape(1, ho, wo, -1).astype(o_ref.dtype)


def _bm2_unit_kernel(x_ref,
                     wd1_ref, bd1_ref, wp_ref, bp_ref,          # branch1
                     w1_ref, b1_ref, wd2_ref, bd2_ref, w2_ref, b2_ref,  # branch2
                     o_ref, padx_ref, padm_ref, *, stride, h, w, ho, wo):
    """Whole benchmodel=2 unit for one batch element, concat+shuffle folded in.

    branch1: dw3x3(+bias) -> pw(+ReLU), pw columns scattered to EVEN channels.
    branch2: pw1(+ReLU) -> dw3x3(+bias) -> pw2(+ReLU), pw2 cols -> ODD channels.
    out = branch1_full + branch2_full  (disjoint channel support).
    """
    cin = x_ref.shape[-1]
    cmid = w1_ref.shape[-1]
    x3d = x_ref[...].reshape(h, w, cin)
    x2d = x3d.reshape(h * w, cin)

    # ---- branch1: dw3x3 on raw input -> pw (even output channels) ----
    padx_ref[...] = jnp.zeros_like(padx_ref)
    padx_ref[pl.ds(1, h), pl.ds(1, w), :] = x3d.astype(jnp.float32)
    acc1 = _dw3x3_from_padded(padx_ref, wd1_ref, bd1_ref,
                              stride=stride, ho=ho, wo=wo)
    y_left = jnp.dot(acc1.reshape(ho * wo, cin), wp_ref[...],
                     preferred_element_type=jnp.float32)
    y_left = jnp.maximum(y_left + bp_ref[...].astype(jnp.float32), 0.0)

    # ---- branch2: pw1+ReLU -> dw3x3 -> pw2+ReLU (odd output channels) ----
    padm_ref[...] = jnp.zeros_like(padm_ref)
    y1 = jnp.dot(x2d, w1_ref[...], preferred_element_type=jnp.float32)
    y1 = jnp.maximum(y1 + b1_ref[...].astype(jnp.float32), 0.0)
    padm_ref[pl.ds(1, h), pl.ds(1, w), :] = y1.reshape(h, w, cmid)
    acc2 = _dw3x3_from_padded(padm_ref, wd2_ref, bd2_ref,
                              stride=stride, ho=ho, wo=wo)
    y_right = jnp.dot(acc2.reshape(ho * wo, cmid), w2_ref[...],
                      preferred_element_type=jnp.float32)
    y_right = jnp.maximum(y_right + b2_ref[...].astype(jnp.float32), 0.0)

    # ---- combine (channel supports are disjoint: even vs odd) ----
    o_ref[...] = (y_left + y_right).reshape(1, ho, wo, -1).astype(o_ref.dtype)


# ----------------------------------------------------------------------------
# Pallas wrappers (NHWC)
# ----------------------------------------------------------------------------
def _out_hw(h, w, stride):
    return (h + 2 - 3) // stride + 1, (w + 2 - 3) // stride + 1


def fused_branch2(x_nhwc, p, *, stride, c_start):
    """benchmodel=1 branch2 as one pallas_call (channel split folded into w1)."""
    n, h, w, c_total = x_nhwc.shape
    ho, wo = _out_hw(h, w, stride)
    w1o, b1 = p["b2_pw1_w"], p["b2_pw1_b"]        # (Cmid, Cin, 1, 1), (Cmid,)
    wdo, bd = p["b2_dw_w"], p["b2_dw_b"]          # (Cmid, 1, 3, 3), (Cmid,)
    w2o, b2 = p["b2_pw2_w"], p["b2_pw2_b"]        # (Cout, Cmid, 1, 1), (Cout,)
    cmid, cin = w1o.shape[0], w1o.shape[1]
    cout = w2o.shape[0]

    w1 = jnp.transpose(w1o.reshape(cmid, cin))                     # (Cin, Cmid)
    if c_start != 0 or cin != c_total:
        w1 = jnp.zeros((c_total, cmid), w1.dtype).at[c_start:c_start + cin].set(w1)
    wd = jnp.transpose(wdo.reshape(cmid, 9))                       # (9, Cmid)
    w2 = jnp.transpose(w2o.reshape(cout, cmid))                    # (Cmid, Cout)

    kernel = functools.partial(_branch2_kernel, stride=stride,
                               h=h, w=w, ho=ho, wo=wo)
    return pl.pallas_call(
        kernel,
        out_shape=jax.ShapeDtypeStruct((n, ho, wo, cout), x_nhwc.dtype),
        grid_spec=pltpu.PrefetchScalarGridSpec(
            num_scalar_prefetch=0,
            grid=(n,),
            in_specs=[
                pl.BlockSpec((1, h, w, c_total), lambda i: (i, 0, 0, 0)),
                pl.BlockSpec((c_total, cmid), lambda i: (0, 0)),
                pl.BlockSpec((1, cmid), lambda i: (0, 0)),
                pl.BlockSpec((9, cmid), lambda i: (0, 0)),
                pl.BlockSpec((1, cmid), lambda i: (0, 0)),
                pl.BlockSpec((cmid, cout), lambda i: (0, 0)),
                pl.BlockSpec((1, cout), lambda i: (0, 0)),
            ],
            out_specs=pl.BlockSpec((1, ho, wo, cout), lambda i: (i, 0, 0, 0)),
            scratch_shapes=[pltpu.VMEM((h + 2, w + 2, cmid), jnp.float32)],
        ),
        compiler_params=pltpu.CompilerParams(dimension_semantics=("parallel",)),
    )(x_nhwc, w1, b1.reshape(1, cmid), wd, bd.reshape(1, cmid),
      w2, b2.reshape(1, cout))


def fused_unit_bm2(x_nhwc, p, *, stride):
    """Whole benchmodel=2 unit (both branches + concat + shuffle) as ONE call."""
    n, h, w, cin = x_nhwc.shape
    ho, wo = _out_hw(h, w, stride)

    # branch1 params
    wd1o, bd1 = p["b1_dw_w"], p["b1_dw_b"]        # (Cin, 1, 3, 3), (Cin,)
    wpo, bp = p["b1_pw_w"], p["b1_pw_b"]          # (Cout, Cin, 1, 1), (Cout,)
    # branch2 params
    w1o, b1 = p["b2_pw1_w"], p["b2_pw1_b"]        # (Cmid, Cin, 1, 1), (Cmid,)
    wd2o, bd2 = p["b2_dw_w"], p["b2_dw_b"]        # (Cmid, 1, 3, 3), (Cmid,)
    w2o, b2 = p["b2_pw2_w"], p["b2_pw2_b"]        # (Cout, Cmid, 1, 1), (Cout,)

    cmid = w1o.shape[0]
    cout = w2o.shape[0]
    oup = 2 * cout                                 # final (shuffled) width

    # Host-side weight prep; fold concat+channel_shuffle(2) into pw columns:
    #   branch1 -> even output channels, branch2 -> odd output channels.
    wd1 = jnp.transpose(wd1o.reshape(cin, 9))                      # (9, Cin)
    wp = jnp.zeros((cin, oup), jnp.float32).at[:, 0::2].set(
        jnp.transpose(wpo.reshape(cout, cin)))                     # (Cin, oup)
    bpe = jnp.zeros((oup,), jnp.float32).at[0::2].set(bp)

    w1 = jnp.transpose(w1o.reshape(cmid, cin))                     # (Cin, Cmid)
    wd2 = jnp.transpose(wd2o.reshape(cmid, 9))                     # (9, Cmid)
    w2 = jnp.zeros((cmid, oup), jnp.float32).at[:, 1::2].set(
        jnp.transpose(w2o.reshape(cout, cmid)))                    # (Cmid, oup)
    b2e = jnp.zeros((oup,), jnp.float32).at[1::2].set(b2)

    kernel = functools.partial(_bm2_unit_kernel, stride=stride,
                               h=h, w=w, ho=ho, wo=wo)
    return pl.pallas_call(
        kernel,
        out_shape=jax.ShapeDtypeStruct((n, ho, wo, oup), x_nhwc.dtype),
        grid_spec=pltpu.PrefetchScalarGridSpec(
            num_scalar_prefetch=0,
            grid=(n,),
            in_specs=[
                pl.BlockSpec((1, h, w, cin), lambda i: (i, 0, 0, 0)),
                # branch1
                pl.BlockSpec((9, cin), lambda i: (0, 0)),
                pl.BlockSpec((1, cin), lambda i: (0, 0)),
                pl.BlockSpec((cin, oup), lambda i: (0, 0)),
                pl.BlockSpec((1, oup), lambda i: (0, 0)),
                # branch2
                pl.BlockSpec((cin, cmid), lambda i: (0, 0)),
                pl.BlockSpec((1, cmid), lambda i: (0, 0)),
                pl.BlockSpec((9, cmid), lambda i: (0, 0)),
                pl.BlockSpec((1, cmid), lambda i: (0, 0)),
                pl.BlockSpec((cmid, oup), lambda i: (0, 0)),
                pl.BlockSpec((1, oup), lambda i: (0, 0)),
            ],
            out_specs=pl.BlockSpec((1, ho, wo, oup), lambda i: (i, 0, 0, 0)),
            scratch_shapes=[pltpu.VMEM((h + 2, w + 2, cin), jnp.float32),
                            pltpu.VMEM((h + 2, w + 2, cmid), jnp.float32)],
        ),
        compiler_params=pltpu.CompilerParams(dimension_semantics=("parallel",)),
    )(x_nhwc,
      wd1, bd1.reshape(1, cin), wp, bpe.reshape(1, oup),
      w1, b1.reshape(1, cmid), wd2, bd2.reshape(1, cmid),
      w2, b2e.reshape(1, oup))


# ----------------------------------------------------------------------------
# InvertedResidual forward (hot path in Pallas, minimal JAX layout glue)
# ----------------------------------------------------------------------------
def channel_interleave(a, b):
    """NHWC concat(a, b) along C followed by channel_shuffle(groups=2)."""
    n, h, w, c = a.shape
    return jnp.stack([a, b], axis=-1).reshape(n, h, w, 2 * c)


def inverted_residual_forward(x_nchw, params, *, stride, benchmodel):
    x = jnp.transpose(x_nchw, (0, 2, 3, 1))                 # single NCHW->NHWC
    if benchmodel == 1:
        # Passthrough half must keep spatial dims -> stride is 1 in this mode.
        c_half = x.shape[-1] // 2
        left = x[..., :c_half]                              # exact passthrough
        right = fused_branch2(x, params, stride=stride, c_start=c_half)
        out = channel_interleave(left, right)               # concat + shuffle(2)
    elif benchmodel == 2:
        out = fused_unit_bm2(x, params, stride=stride)      # shuffle folded in
    else:
        raise ValueError("benchmodel must be 1 or 2")
    return jnp.transpose(out, (0, 3, 1, 2))                 # single NHWC->NCHW


# ----------------------------------------------------------------------------
# Pure-JAX reference (for correctness check only)
# ----------------------------------------------------------------------------
def channel_shuffle(x_nchw, groups):
    n, c, h, w = x_nchw.shape
    x = x_nchw.reshape(n, groups, c // groups, h, w)
    x = jnp.transpose(x, (0, 2, 1, 3, 4))
    return x.reshape(n, c, h, w)


def _ref_pw(x, w, b, relu):
    y = jax.lax.conv_general_dilated(
        x, w, (1, 1), "VALID", dimension_numbers=("NCHW", "OIHW", "NCHW"))
    y = y + b[None, :, None, None]
    return jnp.maximum(y, 0.0) if relu else y


def _ref_dw(x, w, b, stride):
    c = x.shape[1]
    y = jax.lax.conv_general_dilated(
        x, w, (stride, stride), ((1, 1), (1, 1)),
        dimension_numbers=("NCHW", "OIHW", "NCHW"), feature_group_count=c)
    return y + b[None, :, None, None]


def inverted_residual_reference(x, p, *, stride, benchmodel):
    def b2(z):
        z = _ref_pw(z, p["b2_pw1_w"], p["b2_pw1_b"], True)
        z = _ref_dw(z, p["b2_dw_w"], p["b2_dw_b"], stride)
        return _ref_pw(z, p["b2_pw2_w"], p["b2_pw2_b"], True)

    def b1(z):
        z = _ref_dw(z, p["b1_dw_w"], p["b1_dw_b"], stride)
        return _ref_pw(z, p["b1_pw_w"], p["b1_pw_b"], True)

    if benchmodel == 1:
        c_half = x.shape[1] // 2
        out = jnp.concatenate([x[:, :c_half], b2(x[:, c_half:])], axis=1)
    else:
        out = jnp.concatenate([b1(x), b2(x)], axis=1)
    return channel_shuffle(out, 2)


# ----------------------------------------------------------------------------
# Deterministic parameter init + demo
# ----------------------------------------------------------------------------
def make_params(key, inp, oup, benchmodel):
    oup_inc = oup // 2
    ks = jax.random.split(key, 12)
    p = {}
    b2_in = oup_inc if benchmodel == 1 else inp
    p["b2_pw1_w"] = 0.1 * jax.random.normal(ks[0], (oup_inc, b2_in, 1, 1), jnp.float32)
    p["b2_pw1_b"] = 0.1 * jax.random.normal(ks[1], (oup_inc,), jnp.float32)
    p["b2_dw_w"] = 0.1 * jax.random.normal(ks[2], (oup_inc, 1, 3, 3), jnp.float32)
    p["b2_dw_b"] = 0.1 * jax.random.normal(ks[3], (oup_inc,), jnp.float32)
    p["b2_pw2_w"] = 0.1 * jax.random.normal(ks[4], (oup_inc, oup_inc, 1, 1), jnp.float32)
    p["b2_pw2_b"] = 0.1 * jax.random.normal(ks[5], (oup_inc,), jnp.float32)
    if benchmodel == 2:
        p["b1_dw_w"] = 0.1 * jax.random.normal(ks[6], (inp, 1, 3, 3), jnp.float32)
        p["b1_dw_b"] = 0.1 * jax.random.normal(ks[7], (inp,), jnp.float32)
        p["b1_pw_w"] = 0.1 * jax.random.normal(ks[8], (oup_inc, inp, 1, 1), jnp.float32)
        p["b1_pw_b"] = 0.1 * jax.random.normal(ks[9], (oup_inc,), jnp.float32)
    return p


if __name__ == "__main__":
    key = jax.random.PRNGKey(0)
    k_x1, k_p1, k_x2, k_p2, k_x3, k_p3 = jax.random.split(key, 6)

    # --- case 1: benchmodel=1 (channel split), stride=1, inp == oup ---
    N, C, H, W = 2, 8, 16, 16
    x1 = jax.random.normal(k_x1, (N, C, H, W), jnp.float32)
    p1 = make_params(k_p1, inp=C, oup=C, benchmodel=1)
    out1 = jax.block_until_ready(
        inverted_residual_forward(x1, p1, stride=1, benchmodel=1))
    ref1 = inverted_residual_reference(x1, p1, stride=1, benchmodel=1)
    assert out1.shape == (N, C, H, W)
    assert jnp.allclose(out1, ref1, atol=1e-4, rtol=1e-4), "bm=1 stride=1 mismatch"

    # --- case 2: benchmodel=2 (dual branch), stride=2 downsample unit ---
    inp2, oup2 = 4, 8
    x2 = jax.random.normal(k_x2, (N, inp2, H, W), jnp.float32)
    p2 = make_params(k_p2, inp=inp2, oup=oup2, benchmodel=2)
    out2 = jax.block_until_ready(
        inverted_residual_forward(x2, p2, stride=2, benchmodel=2))
    ref2 = inverted_residual_reference(x2, p2, stride=2, benchmodel=2)
    assert out2.shape == (N, oup2, H // 2, W // 2)
    assert jnp.allclose(out2, ref2, atol=1e-4, rtol=1e-4), "bm=2 stride=2 mismatch"

    # --- case 3: benchmodel=2, stride=1 ---
    x3 = jax.random.normal(k_x3, (N, inp2, H, W), jnp.float32)
    p3 = make_params(k_p3, inp=inp2, oup=oup2, benchmodel=2)
    out3 = jax.block_until_ready(
        inverted_residual_forward(x3, p3, stride=1, benchmodel=2))
    ref3 = inverted_residual_reference(x3, p3, stride=1, benchmodel=2)
    assert out3.shape == (N, oup2, H, W)
    assert jnp.allclose(out3, ref3, atol=1e-4, rtol=1e-4), "bm=2 stride=1 mismatch"

    print("KERNEL_OK")
</pallas_src>

<mosaic_0001>
module attributes {stable_mosaic.version = 11 : i64} {
  func.func @_branch2_kernel(%arg0: i32, %arg1: memref<1x16x16x8xf32, #tpu.memory_space<vmem>>, %arg2: memref<8x4xf32, #tpu.memory_space<vmem>>, %arg3: memref<1x4xf32, #tpu.memory_space<vmem>>, %arg4: memref<9x4xf32, #tpu.memory_space<vmem>>, %arg5: memref<1x4xf32, #tpu.memory_space<vmem>>, %arg6: memref<4x4xf32, #tpu.memory_space<vmem>>, %arg7: memref<1x4xf32, #tpu.memory_space<vmem>>, %arg8: memref<1x16x16x4xf32, #tpu.memory_space<vmem>>, %arg9: memref<18x18x4xf32, #tpu.memory_space<vmem>>) attributes {dimension_semantics = [#tpu.dimension_semantics<parallel>], iteration_bounds = array<i64: 2>, scalar_prefetch = 0 : i64, scratch_operands = 1 : i64, tpu.core_type = #tpu.core_type<tc>, window_params = [{transform_indices = @transform_0, window_bounds = array<i64: 1, 16, 16, 8>}, {pipeline_mode = #tpu.pipeline_mode<synchronous>, transform_indices = @transform_1, window_bounds = array<i64: 8, 4>}, {pipeline_mode = #tpu.pipeline_mode<synchronous>, transform_indices = @transform_2, window_bounds = array<i64: 1, 4>}, {pipeline_mode = #tpu.pipeline_mode<synchronous>, transform_indices = @transform_3, window_bounds = array<i64: 9, 4>}, {pipeline_mode = #tpu.pipeline_mode<synchronous>, transform_indices = @transform_4, window_bounds = array<i64: 1, 4>}, {pipeline_mode = #tpu.pipeline_mode<synchronous>, transform_indices = @transform_5, window_bounds = array<i64: 4, 4>}, {pipeline_mode = #tpu.pipeline_mode<synchronous>, transform_indices = @transform_6, window_bounds = array<i64: 1, 4>}, {transform_indices = @transform_7, window_bounds = array<i64: 1, 16, 16, 4>}]} {
    %cst = arith.constant 0.000000e+00 : f32
    %0 = vector.broadcast %cst : f32 to vector<18x18x4xf32>
    %c0 = arith.constant 0 : index
    %c0_0 = arith.constant 0 : index
    %c0_1 = arith.constant 0 : index
    %1 = vector.load %arg9[%c0, %c0_0, %c0_1] : memref<18x18x4xf32, #tpu.memory_space<vmem>>, vector<18x18x4xf32>
    tpu.vector_store %arg9[%c0, %c0_0, %c0_1], %0 {strides = array<i32>} : memref<18x18x4xf32, #tpu.memory_space<vmem>>, vector<18x18x4xf32>,
    %c0_2 = arith.constant 0 : index
    %c0_3 = arith.constant 0 : index
    %c0_4 = arith.constant 0 : index
    %c0_5 = arith.constant 0 : index
    %2 = vector.load %arg1[%c0_2, %c0_3, %c0_4, %c0_5] : memref<1x16x16x8xf32, #tpu.memory_space<vmem>>, vector<1x16x16x8xf32>
    %3 = vector.shape_cast %2 : vector<1x16x16x8xf32> to vector<256x8xf32>
    %c0_6 = arith.constant 0 : index
    %c0_7 = arith.constant 0 : index
    %4 = vector.load %arg2[%c0_6, %c0_7] : memref<8x4xf32, #tpu.memory_space<vmem>>, vector<8x4xf32>
    %cst_8 = arith.constant dense<0.000000e+00> : vector<256x4xf32>
    %5 = tpu.matmul %3, %4, %cst_8 {dimension_numbers = #tpu.dot_dimension_numbers<[1], [0], [0], [1], [0, 0, 1, 1], [], []>} : vector<256x8xf32>, vector<8x4xf32>, vector<256x4xf32> -> vector<256x4xf32>
    %c0_9 = arith.constant 0 : index
    %c0_10 = arith.constant 0 : index
    %6 = vector.load %arg3[%c0_9, %c0_10] : memref<1x4xf32, #tpu.memory_space<vmem>>, vector<1x4xf32>
    %7 = vector.broadcast %6 : vector<1x4xf32> to vector<256x4xf32>
    %8 = arith.addf %5, %7 : vector<256x4xf32>
    %cst_11 = arith.constant 0.000000e+00 : f32
    %9 = vector.broadcast %cst_11 : f32 to vector<256x4xf32>
    %10 = arith.maximumf %8, %9 : vector<256x4xf32>
    %11 = vector.shape_cast %10 : vector<256x4xf32> to vector<16x16x4xf32>
    %c1 = arith.constant 1 : index
    %c1_12 = arith.constant 1 : index
    %c0_13 = arith.constant 0 : index
    %12 = vector.load %arg9[%c1, %c1_12, %c0_13] : memref<18x18x4xf32, #tpu.memory_space<vmem>>, vector<16x16x4xf32>
    tpu.vector_store %arg9[%c1, %c1_12, %c0_13], %11 {strides = array<i32>} : memref<18x18x4xf32, #tpu.memory_space<vmem>>, vector<16x16x4xf32>,
    %c0_14 = arith.constant 0 : index
    %c0_15 = arith.constant 0 : index
    %13 = vector.load %arg4[%c0_14, %c0_15] : memref<9x4xf32, #tpu.memory_space<vmem>>, vector<9x4xf32>
    %cst_16 = arith.constant 0.000000e+00 : f32
    %14 = vector.broadcast %cst_16 : f32 to vector<16x16x4xf32>
    %c0_17 = arith.constant 0 : index
    %c0_18 = arith.constant 0 : index
    %15 = vector.load %arg5[%c0_17, %c0_18] : memref<1x4xf32, #tpu.memory_space<vmem>>, vector<1x4xf32>
    %16 = vector.shape_cast %15 : vector<1x4xf32> to vector<1x1x4xf32>
    %17 = vector.broadcast %16 : vector<1x1x4xf32> to vector<16x16x4xf32>
    %18 = arith.addf %14, %17 : vector<16x16x4xf32>
    %c0_19 = arith.constant 0 : index
    %c0_20 = arith.constant 0 : index
    %c0_21 = arith.constant 0 : index
    %19 = vector.load %arg9[%c0_19, %c0_20, %c0_21] : memref<18x18x4xf32, #tpu.memory_space<vmem>>, vector<16x16x4xf32>
    %20 = vector.extract_strided_slice %13 {offsets = [0, 0], sizes = [1, 4], strides = [1, 1]} : vector<9x4xf32> to vector<1x4xf32>
    %21 = vector.shape_cast %20 : vector<1x4xf32> to vector<4xf32>
    %22 = vector.shape_cast %21 : vector<4xf32> to vector<1x1x4xf32>
    %23 = vector.broadcast %22 : vector<1x1x4xf32> to vector<16x16x4xf32>
    %24 = arith.mulf %19, %23 : vector<16x16x4xf32>
    %25 = arith.addf %18, %24 : vector<16x16x4xf32>
    %c0_22 = arith.constant 0 : index
    %c1_23 = arith.constant 1 : index
    %c0_24 = arith.constant 0 : index
    %26 = vector.load %arg9[%c0_22, %c1_23, %c0_24] : memref<18x18x4xf32, #tpu.memory_space<vmem>>, vector<16x16x4xf32>
    %27 = vector.extract_strided_slice %13 {offsets = [1, 0], sizes = [1, 4], strides = [1, 1]} : vector<9x4xf32> to vector<1x4xf32>
    %28 = vector.shape_cast %27 : vector<1x4xf32> to vector<4xf32>
    %29 = vector.shape_cast %28 : vector<4xf32> to vector<1x1x4xf32>
    %30 = vector.broadcast %29 : vector<1x1x4xf32> to vector<16x16x4xf32>
    %31 = arith.mulf %26, %30 : vector<16x16x4xf32>
    %32 = arith.addf %25, %31 : vector<16x16x4xf32>
    %c0_25 = arith.constant 0 : index
    %c2 = arith.constant 2 : index
    %c0_26 = arith.constant 0 : index
    %33 = vector.load %arg9[%c0_25, %c2, %c0_26] : memref<18x18x4xf32, #tpu.memory_space<vmem>>, vector<16x16x4xf32>
    %34 = vector.extract_strided_slice %13 {offsets = [2, 0], sizes = [1, 4], strides = [1, 1]} : vector<9x4xf32> to vector<1x4xf32>
    %35 = vector.shape_cast %34 : vector<1x4xf32> to vector<4xf32>
    %36 = vector.shape_cast %35 : vector<4xf32> to vector<1x1x4xf32>
    %37 = vector.broadcast %36 : vector<1x1x4xf32> to vector<16x16x4xf32>
    %38 = arith.mulf %33, %37 : vector<16x16x4xf32>
    %39 = arith.addf %32, %38 : vector<16x16x4xf32>
    %c1_27 = arith.constant 1 : index
    %c0_28 = arith.constant 0 : index
    %c0_29 = arith.constant 0 : index
    %40 = vector.load %arg9[%c1_27, %c0_28, %c0_29] : memref<18x18x4xf32, #tpu.memory_space<vmem>>, vector<16x16x4xf32>
    %41 = vector.extract_strided_slice %13 {offsets = [3, 0], sizes = [1, 4], strides = [1, 1]} : vector<9x4xf32> to vector<1x4xf32>
    %42 = vector.shape_cast %41 : vector<1x4xf32> to vector<4xf32>
    %43 = vector.shape_cast %42 : vector<4xf32> to vector<1x1x4xf32>
    %44 = vector.broadcast %43 : vector<1x1x4xf32> to vector<16x16x4xf32>
    %45 = arith.mulf %40, %44 : vector<16x16x4xf32>
    %46 = arith.addf %39, %45 : vector<16x16x4xf32>
    %c1_30 = arith.constant 1 : index
    %c1_31 = arith.constant 1 : index
    %c0_32 = arith.constant 0 : index
    %47 = vector.load %arg9[%c1_30, %c1_31, %c0_32] : memref<18x18x4xf32, #tpu.memory_space<vmem>>, vector<16x16x4xf32>
    %48 = vector.extract_strided_slice %13 {offsets = [4, 0], sizes = [1, 4], strides = [1, 1]} : vector<9x4xf32> to vector<1x4xf32>
    %49 = vector.shape_cast %48 : vector<1x4xf32> to vector<4xf32>
    %50 = vector.shape_cast %49 : vector<4xf32> to vector<1x1x4xf32>
    %51 = vector.broadcast %50 : vector<1x1x4xf32> to vector<16x16x4xf32>
    %52 = arith.mulf %47, %51 : vector<16x16x4xf32>
    %53 = arith.addf %46, %52 : vector<16x16x4xf32>
    %c1_33 = arith.constant 1 : index
    %c2_34 = arith.constant 2 : index
    %c0_35 = arith.constant 0 : index
    %54 = vector.load %arg9[%c1_33, %c2_34, %c0_35] : memref<18x18x4xf32, #tpu.memory_space<vmem>>, vector<16x16x4xf32>
    %55 = vector.extract_strided_slice %13 {offsets = [5, 0], sizes = [1, 4], strides = [1, 1]} : vector<9x4xf32> to vector<1x4xf32>
    %56 = vector.shape_cast %55 : vector<1x4xf32> to vector<4xf32>
    %57 = vector.shape_cast %56 : vector<4xf32> to vector<1x1x4xf32>
    %58 = vector.broadcast %57 : vector<1x1x4xf32> to vector<16x16x4xf32>
    %59 = arith.mulf %54, %58 : vector<16x16x4xf32>
    %60 = arith.addf %53, %59 : vector<16x16x4xf32>
    %c2_36 = arith.constant 2 : index
    %c0_37 = arith.constant 0 : index
    %c0_38 = arith.constant 0 : index
    %61 = vector.load %arg9[%c2_36, %c0_37, %c0_38] : memref<18x18x4xf32, #tpu.memory_space<vmem>>, vector<16x16x4xf32>
    %62 = vector.extract_strided_slice %13 {offsets = [6, 0], sizes = [1, 4], strides = [1, 1]} : vector<9x4xf32> to vector<1x4xf32>
    %63 = vector.shape_cast %62 : vector<1x4xf32> to vector<4xf32>
    %64 = vector.shape_cast %63 : vector<4xf32> to vector<1x1x4xf32>
    %65 = vector.broadcast %64 : vector<1x1x4xf32> to vector<16x16x4xf32>
    %66 = arith.mulf %61, %65 : vector<16x16x4xf32>
    %67 = arith.addf %60, %66 : vector<16x16x4xf32>
    %c2_39 = arith.constant 2 : index
    %c1_40 = arith.constant 1 : index
    %c0_41 = arith.constant 0 : index
    %68 = vector.load %arg9[%c2_39, %c1_40, %c0_41] : memref<18x18x4xf32, #tpu.memory_space<vmem>>, vector<16x16x4xf32>
    %69 = vector.extract_strided_slice %13 {offsets = [7, 0], sizes = [1, 4], strides = [1, 1]} : vector<9x4xf32> to vector<1x4xf32>
    %70 = vector.shape_cast %69 : vector<1x4xf32> to vector<4xf32>
    %71 = vector.shape_cast %70 : vector<4xf32> to vector<1x1x4xf32>
    %72 = vector.broadcast %71 : vector<1x1x4xf32> to vector<16x16x4xf32>
    %73 = arith.mulf %68, %72 : vector<16x16x4xf32>
    %74 = arith.addf %67, %73 : vector<16x16x4xf32>
    %c2_42 = arith.constant 2 : index
    %c2_43 = arith.constant 2 : index
    %c0_44 = arith.constant 0 : index
    %75 = vector.load %arg9[%c2_42, %c2_43, %c0_44] : memref<18x18x4xf32, #tpu.memory_space<vmem>>, vector<16x16x4xf32>
    %76 = vector.extract_strided_slice %13 {offsets = [8, 0], sizes = [1, 4], strides = [1, 1]} : vector<9x4xf32> to vector<1x4xf32>
    %77 = vector.shape_cast %76 : vector<1x4xf32> to vector<4xf32>
    %78 = vector.shape_cast %77 : vector<4xf32> to vector<1x1x4xf32>
    %79 = vector.broadcast %78 : vector<1x1x4xf32> to vector<16x16x4xf32>
    %80 = arith.mulf %75, %79 : vector<16x16x4xf32>
    %81 = arith.addf %74, %80 : vector<16x16x4xf32>
    %82 = vector.shape_cast %81 : vector<16x16x4xf32> to vector<256x4xf32>
    %c0_45 = arith.constant 0 : index
    %c0_46 = arith.constant 0 : index
    %83 = vector.load %arg6[%c0_45, %c0_46] : memref<4x4xf32, #tpu.memory_space<vmem>>, vector<4x4xf32>
    %cst_47 = arith.constant dense<0.000000e+00> : vector<256x4xf32>
    %84 = tpu.matmul %82, %83, %cst_47 {dimension_numbers = #tpu.dot_dimension_numbers<[1], [0], [0], [1], [0, 0, 1, 1], [], []>} : vector<256x4xf32>, vector<4x4xf32>, vector<256x4xf32> -> vector<256x4xf32>
    %c0_48 = arith.constant 0 : index
    %c0_49 = arith.constant 0 : index
    %85 = vector.load %arg7[%c0_48, %c0_49] : memref<1x4xf32, #tpu.memory_space<vmem>>, vector<1x4xf32>
    %86 = vector.broadcast %85 : vector<1x4xf32> to vector<256x4xf32>
    %87 = arith.addf %84, %86 : vector<256x4xf32>
    %cst_50 = arith.constant 0.000000e+00 : f32
    %88 = vector.broadcast %cst_50 : f32 to vector<256x4xf32>
    %89 = arith.maximumf %87, %88 : vector<256x4xf32>
    %90 = vector.shape_cast %89 : vector<256x4xf32> to vector<1x16x16x4xf32>
    %c0_51 = arith.constant 0 : index
    %c0_52 = arith.constant 0 : index
    %c0_53 = arith.constant 0 : index
    %c0_54 = arith.constant 0 : index
    %91 = vector.load %arg8[%c0_51, %c0_52, %c0_53, %c0_54] : memref<1x16x16x4xf32, #tpu.memory_space<vmem>>, vector<1x16x16x4xf32>
    tpu.vector_store %arg8[%c0_51, %c0_52, %c0_53, %c0_54], %90 {strides = array<i32>} : memref<1x16x16x4xf32, #tpu.memory_space<vmem>>, vector<1x16x16x4xf32>,
    return
  }
  func.func @transform_0(%arg0: i32) -> (i32, i32, i32, i32) {
    %c0_i32 = arith.constant 0 : i32
    %c0_i32_0 = arith.constant 0 : i32
    %c0_i32_1 = arith.constant 0 : i32
    %c0_i32_2 = arith.constant 0 : i32
    return %arg0, %c0_i32, %c0_i32_0, %c0_i32_1 : i32, i32, i32, i32
  }
  func.func @transform_1(%arg0: i32) -> (i32, i32) {
    %c0_i32 = arith.constant 0 : i32
    %c0_i32_0 = arith.constant 0 : i32
    %c0_i32_1 = arith.constant 0 : i32
    return %c0_i32, %c0_i32_0 : i32, i32
  }
  func.func @transform_2(%arg0: i32) -> (i32, i32) {
    %c0_i32 = arith.constant 0 : i32
    %c0_i32_0 = arith.constant 0 : i32
    %c0_i32_1 = arith.constant 0 : i32
    return %c0_i32, %c0_i32_0 : i32, i32
  }
  func.func @transform_3(%arg0: i32) -> (i32, i32) {
    %c0_i32 = arith.constant 0 : i32
    %c0_i32_0 = arith.constant 0 : i32
    %c0_i32_1 = arith.constant 0 : i32
    return %c0_i32, %c0_i32_0 : i32, i32
  }
  func.func @transform_4(%arg0: i32) -> (i32, i32) {
    %c0_i32 = arith.constant 0 : i32
    %c0_i32_0 = arith.constant 0 : i32
    %c0_i32_1 = arith.constant 0 : i32
    return %c0_i32, %c0_i32_0 : i32, i32
  }
  func.func @transform_5(%arg0: i32) -> (i32, i32) {
    %c0_i32 = arith.constant 0 : i32
    %c0_i32_0 = arith.constant 0 : i32
    %c0_i32_1 = arith.constant 0 : i32
    return %c0_i32, %c0_i32_0 : i32, i32
  }
  func.func @transform_6(%arg0: i32) -> (i32, i32) {
    %c0_i32 = arith.constant 0 : i32
    %c0_i32_0 = arith.constant 0 : i32
    %c0_i32_1 = arith.constant 0 : i32
    return %c0_i32, %c0_i32_0 : i32, i32
  }
  func.func @transform_7(%arg0: i32) -> (i32, i32, i32, i32) {
    %c0_i32 = arith.constant 0 : i32
    %c0_i32_0 = arith.constant 0 : i32
    %c0_i32_1 = arith.constant 0 : i32
    %c0_i32_2 = arith.constant 0 : i32
    return %arg0, %c0_i32, %c0_i32_0, %c0_i32_1 : i32, i32, i32, i32
  }
}

</mosaic_0001>

<llo_original>
// kernel: tpu_custom_call.1
$region0: #{tpu_custom_call.1}
  #allocation0 [shape = 'u32[]', space=smem, size = 0x4, offset = 0x4, fixed_abs, tag = 'smem constant byte address 0x4 - core index']
  #allocation1 [shape = 'u32[72,128]{1,0:T(1,128)}', space=vmem, size = 0x9000, scoped, tag = 'internal scratch']
  #allocation2 [shape = 'f32[18,18,4]{2,1,0:T(8,128)}', space=vmem, size = 0x36000, scoped, tag = 'scratch operand']
  %s0 = inlined_call_operand.vmem [shape: f32[2,16,16,8], index: 0, kind: input, shape index: {}]
  %s1 = inlined_call_operand.vmem [shape: f32[8,4], index: 1, kind: input, shape index: {}]
  %s2 = inlined_call_operand.vmem [shape: f32[1,4], index: 2, kind: input, shape index: {}]
  %s3 = inlined_call_operand.vmem [shape: f32[9,4], index: 3, kind: input, shape index: {}]
  %s4 = inlined_call_operand.vmem [shape: f32[1,4], index: 4, kind: input, shape index: {}]
  %s5 = inlined_call_operand.vmem [shape: f32[4,4], index: 5, kind: input, shape index: {}]
  %s6 = inlined_call_operand.vmem [shape: f32[1,4], index: 6, kind: input, shape index: {}]
  %s7 = inlined_call_operand.vmem [shape: f32[2,16,16,4], index: 7, kind: output, shape index: {}]
  %s8 = sld [smem:[#allocation0]]
  $region61: #{tpu_custom_call.1} parent=0
    _
  %s10 = ssub.s32 1, %s8
  %s11 = scalar_select 0, %s10, %s8
  loop: start=0, step=1, limit=4
  $region2: #{tpu_custom_call.1} parent=0 // loop_pre_header
    _
  $region3: #{tpu_custom_call.1} parent=0 // loop_header
    %s13 = sphi 0, %s17
    %p14 = scmp.ge.s32.totalorder %s13, 4
    %s23 = sphi 0, %s25
    %s26 = sphi 0, %s23
    %s27 = sphi 0, %s26
    %s43 = sphi 0, %s27
    %s47 = sphi 0, %s47
    %s49 = sphi 0, %s47
    %s50 = sphi 0, %s49
    %s64 = sphi 0, %s50
    %s68 = sphi 0, %s68
    %s70 = sphi 0, %s68
    %s71 = sphi 0, %s70
    %s85 = sphi 0, %s71
    %s89 = sphi 0, %s89
    %s91 = sphi 0, %s89
    %s92 = sphi 0, %s91
    %s106 = sphi 0, %s92
    %s110 = sphi 0, %s110
    %s112 = sphi 0, %s110
    %s113 = sphi 0, %s112
    %s127 = sphi 0, %s113
    %s131 = sphi 0, %s131
    %s133 = sphi 0, %s131
    %s134 = sphi 0, %s133
    %s148 = sphi 0, %s134
    %s152 = sphi 0, %s152
    %s154 = sphi 0, %s152
    %s155 = sphi 0, %s154
    %s169 = sphi 0, %s155
    %s175 = sphi 0, %s177
    %s178 = sphi 0, %s175
    %s179 = sphi 0, %s178
    %s195 = sphi 0, %s179
  $region4: #{tpu_custom_call.1} parent=0 // loop_header_branch
    %16 = sbr.rel (%p14) target = $region8
  $region5: #{tpu_custom_call.1} parent=0 // loop_body
    %s18 = ssub.s32 %s13, 1
    %s19 = ssub.s32 %s13, 2
    %s20 = sadd.s32 %s13, 1
    %s21 = ssub.s32 %s13, %s20
    %p22 = scmp.eq.s32.totalorder %s21, 0
    %s24 = sadd.s32 %s23, 1
    %s25 = scalar_select %p22, %s23, %s24
    %p28 = pneg %p22
    %p29 = scmp.eq.s32.totalorder %s13, 1
    %p30 = por %p28, %p29
    %p31 = scmp.ne.s32.totalorder %s23, %s26
    %p32 = scmp.eq.s32.totalorder %s13, 0
    %p33 = por %p31, %p32
    %p34 = scmp.ne.s32.totalorder %s23, %s26
    %p35 = scmp.eq.s32.totalorder %s18, 1
    %p36 = por %p34, %p35
    %p37 = scmp.ne.s32.totalorder %s26, %s27
    %p38 = scmp.eq.s32.totalorder %s18, 0
    %p39 = por %p37, %p38
    %p40 = scmp.ne.s32.totalorder %s26, %s27
    %p41 = scmp.eq.s32.totalorder %s19, 1
    %p42 = por %p40, %p41
    %p44 = scmp.ne.s32.totalorder %s27, %s43
    %p45 = scmp.eq.s32.totalorder %s19, 0
    %p46 = por %p44, %p45
    %s48 = sadd.s32 %s47, 1
    %p51 = scmp.eq.s32.totalorder %s13, 1
    %p52 = scmp.ne.s32.totalorder %s47, %s49
    %p53 = scmp.eq.s32.totalorder %s13, 0
    %p54 = por %p52, %p53
    %p55 = scmp.ne.s32.totalorder %s47, %s49
    %p56 = scmp.eq.s32.totalorder %s18, 1
    %p57 = por %p55, %p56
    %p58 = scmp.ne.s32.totalorder %s49, %s50
    %p59 = scmp.eq.s32.totalorder %s18, 0
    %p60 = por %p58, %p59
    %p61 = scmp.ne.s32.totalorder %s49, %s50
    %p62 = scmp.eq.s32.totalorder %s19, 1
    %p63 = por %p61, %p62
    %p65 = scmp.ne.s32.totalorder %s50, %s64
    %p66 = scmp.eq.s32.totalorder %s19, 0
    %p67 = por %p65, %p66
    %s69 = sadd.s32 %s68, 1
    %p72 = scmp.eq.s32.totalorder %s13, 1
    %p73 = scmp.ne.s32.totalorder %s68, %s70
    %p74 = scmp.eq.s32.totalorder %s13, 0
    %p75 = por %p73, %p74
    %p76 = scmp.ne.s32.totalorder %s68, %s70
    %p77 = scmp.eq.s32.totalorder %s18, 1
    %p78 = por %p76, %p77
    %p79 = scmp.ne.s32.totalorder %s70, %s71
    %p80 = scmp.eq.s32.totalorder %s18, 0
    %p81 = por %p79, %p80
    %p82 = scmp.ne.s32.totalorder %s70, %s71
    %p83 = scmp.eq.s32.totalorder %s19, 1
    %p84 = por %p82, %p83
    %p86 = scmp.ne.s32.totalorder %s71, %s85
    %p87 = scmp.eq.s32.totalorder %s19, 0
    %p88 = por %p86, %p87
    %s90 = sadd.s32 %s89, 1
    %p93 = scmp.eq.s32.totalorder %s13, 1
    %p94 = scmp.ne.s32.totalorder %s89, %s91
    %p95 = scmp.eq.s32.totalorder %s13, 0
    %p96 = por %p94, %p95
    %p97 = scmp.ne.s32.totalorder %s89, %s91
    %p98 = scmp.eq.s32.totalorder %s18, 1
    %p99 = por %p97, %p98
    %p100 = scmp.ne.s32.totalorder %s91, %s92
    %p101 = scmp.eq.s32.totalorder %s18, 0
    %p102 = por %p100, %p101
    %p103 = scmp.ne.s32.totalorder %s91, %s92
    %p104 = scmp.eq.s32.totalorder %s19, 1
    %p105 = por %p103, %p104
    %p107 = scmp.ne.s32.totalorder %s92, %s106
    %p108 = scmp.eq.s32.totalorder %s19, 0
    %p109 = por %p107, %p108
    %s111 = sadd.s32 %s110, 1
    %p114 = scmp.eq.s32.totalorder %s13, 1
    %p115 = scmp.ne.s32.totalorder %s110, %s112
    %p116 = scmp.eq.s32.totalorder %s13, 0
    %p117 = por %p115, %p116
    %p118 = scmp.ne.s32.totalorder %s110, %s112
    %p119 = scmp.eq.s32.totalorder %s18, 1
    %p120 = por %p118, %p119
    %p121 = scmp.ne.s32.totalorder %s112, %s113
    %p122 = scmp.eq.s32.totalorder %s18, 0
    %p123 = por %p121, %p122
    %p124 = scmp.ne.s32.totalorder %s112, %s113
    %p125 = scmp.eq.s32.totalorder %s19, 1
    %p126 = por %p124, %p125
    %p128 = scmp.ne.s32.totalorder %s113, %s127
    %p129 = scmp.eq.s32.totalorder %s19, 0
    %p130 = por %p128, %p129
    %s132 = sadd.s32 %s131, 1
    %p135 = scmp.eq.s32.totalorder %s13, 1
    %p136 = scmp.ne.s32.totalorder %s131, %s133
    %p137 = scmp.eq.s32.totalorder %s13, 0
    %p138 = por %p136, %p137
    %p139 = scmp.ne.s32.totalorder %s131, %s133
    %p140 = scmp.eq.s32.totalorder %s18, 1
    %p141 = por %p139, %p140
    %p142 = scmp.ne.s32.totalorder %s133, %s134
    %p143 = scmp.eq.s32.totalorder %s18, 0
    %p144 = por %p142, %p143
    %p145 = scmp.ne.s32.totalorder %s133, %s134
    %p146 = scmp.eq.s32.totalorder %s19, 1
    %p147 = por %p145, %p146
    %p149 = scmp.ne.s32.totalorder %s134, %s148
    %p150 = scmp.eq.s32.totalorder %s19, 0
    %p151 = por %p149, %p150
    %s153 = sadd.s32 %s152, 1
    %p156 = scmp.eq.s32.totalorder %s13, 1
    %p157 = scmp.ne.s32.totalorder %s152, %s154
    %p158 = scmp.eq.s32.totalorder %s13, 0
    %p159 = por %p157, %p158
    %p160 = scmp.ne.s32.totalorder %s152, %s154
    %p161 = scmp.eq.s32.totalorder %s18, 1
    %p162 = por %p160, %p161
    %p163 = scmp.ne.s32.totalorder %s154, %s155
    %p164 = scmp.eq.s32.totalorder %s18, 0
    %p165 = por %p163, %p164
    %p166 = scmp.ne.s32.totalorder %s154, %s155
    %p167 = scmp.eq.s32.totalorder %s19, 1
    %p168 = por %p166, %p167
    %p170 = scmp.ne.s32.totalorder %s155, %s169
    %p171 = scmp.eq.s32.totalorder %s19, 0
    %p172 = por %p170, %p171
    %s173 = ssub.s32 %s13, %s20
    %p174 = scmp.eq.s32.totalorder %s173, 0
    %s176 = sadd.s32 %s175, 1
    %s177 = scalar_select %p174, %s175, %s176
    %p180 = pneg %p174
    %p181 = scmp.eq.s32.totalorder %s13, 1
    %p182 = por %p180, %p181
    %p183 = scmp.ne.s32.totalorder %s175, %s178
    %p184 = scmp.eq.s32.totalorder %s13, 0
    %p185 = por %p183, %p184
    %p186 = scmp.ne.s32.totalorder %s175, %s178
    %p187 = scmp.eq.s32.totalorder %s18, 1
    %p188 = por %p186, %p187
    %p189 = scmp.ne.s32.totalorder %s178, %s179
    %p190 = scmp.eq.s32.totalorder %s18, 0
    %p191 = por %p189, %p190
    %p192 = scmp.ne.s32.totalorder %s178, %s179
    %p193 = scmp.eq.s32.totalorder %s19, 1
    %p194 = por %p192, %p193
    %p196 = scmp.ne.s32.totalorder %s179, %s195
    %p197 = scmp.eq.s32.totalorder %s19, 0
    %p198 = por %p196, %p197
    %p199 = scmp.le.s32.totalorder 1, %s13
    %p200 = scmp.lt.s32.totalorder %s13, 3
    %p201 = pnand %p199, %p200
    %p202 = pneg %p201
    // Predicated region
    $region9: #{tpu_custom_call.1} parent=5 // pred_check
      _
    $region10: #{tpu_custom_call.1} parent=5 // pred_check_branch
      %204 = sbr.rel (%p201) target = $region12
    $region11: #{tpu_custom_call.1} parent=5 // pred_region
      %s205 = ssub.s32 %s13, 1
      // Predicated region
      $region13: #{tpu_custom_call.1} parent=11 // pred_check
        %p206 = pneg %p60
      $region14: #{tpu_custom_call.1} parent=11 // pred_check_branch
        %208 = sbr.rel (%p206) target = $region16
      $region15: #{tpu_custom_call.1} parent=11 // pred_region
        _
      $region16: #{tpu_custom_call.1} parent=11 // pred_fallthru
        _
      // Predicated region
      $region17: #{tpu_custom_call.1} parent=11 // pred_check
        %p209 = pneg %p81
      $region18: #{tpu_custom_call.1} parent=11 // pred_check_branch
        %211 = sbr.rel (%p209) target = $region20
      $region19: #{tpu_custom_call.1} parent=11 // pred_region
        _
      $region20: #{tpu_custom_call.1} parent=11 // pred_fallthru
        _
      // Predicated region
      $region21: #{tpu_custom_call.1} parent=11 // pred_check
        %p212 = pneg %p102
      $region22: #{tpu_custom_call.1} parent=11 // pred_check_branch
        %214 = sbr.rel (%p212) target = $region24
      $region23: #{tpu_custom_call.1} parent=11 // pred_region
        _
      $region24: #{tpu_custom_call.1} parent=11 // pred_fallthru
        _
      // Predicated region
      $region25: #{tpu_custom_call.1} parent=11 // pred_check
        %p215 = pneg %p123
      $region26: #{tpu_custom_call.1} parent=11 // pred_check_branch
        %217 = sbr.rel (%p215) target = $region28
      $region27: #{tpu_custom_call.1} parent=11 // pred_region
        _
      $region28: #{tpu_custom_call.1} parent=11 // pred_fallthru
        _
      // Predicated region
      $region29: #{tpu_custom_call.1} parent=11 // pred_check
        %p218 = pneg %p144
      $region30: #{tpu_custom_call.1} parent=11 // pred_check_branch
        %220 = sbr.rel (%p218) target = $region32
      $region31: #{tpu_custom_call.1} parent=11 // pred_region
        _
      $region32: #{tpu_custom_call.1} parent=11 // pred_fallthru
        _
      // Predicated region
      $region33: #{tpu_custom_call.1} parent=11 // pred_check
        %p221 = pneg %p165
      $region34: #{tpu_custom_call.1} parent=11 // pred_check_branch
        %223 = sbr.rel (%p221) target = $region36
      $region35: #{tpu_custom_call.1} parent=11 // pred_region
        _
      $region36: #{tpu_custom_call.1} parent=11 // pred_fallthru
        _
    $region12: #{tpu_custom_call.1} parent=5 // pred_fallthru
      _
    %p224 = scmp.lt.s32.totalorder %s13, 2
    // Predicated region
    $region37: #{tpu_custom_call.1} parent=5 // pred_check
      %p225 = pneg %p224
    $region38: #{tpu_custom_call.1} parent=5 // pred_check_branch
      %227 = sbr.rel (%p225) target = $region40
    $region39: #{tpu_custom_call.1} parent=5 // pred_region
      // Predicated region
      $region41: #{tpu_custom_call.1} parent=39 // pred_check
        %p228 = pneg %p33
      $region42: #{tpu_custom_call.1} parent=39 // pred_check_branch
        %230 = sbr.rel (%p228) target = $region44
      $region43: #{tpu_custom_call.1} parent=39 // pred_region
        %p231 = scmp.lt.s32.totalorder %s13, 1
        %s232 = scalar_select %p231, %s13, 1
        %s233 = smul.addr %s232, 32
        %s234 = smul.addr %s233, 8
        %s235 = scalar_lea.vmem %s0, %s234
      $region44: #{tpu_custom_call.1} parent=39 // pred_fallthru
        _
    $region40: #{tpu_custom_call.1} parent=5 // pred_fallthru
      _
    %p236 = scmp.le.s32.totalorder 1, %s13
    %p237 = scmp.lt.s32.totalorder %s13, 3
    %p238 = pnand %p236, %p237
    %p239 = pneg %p238
    // Predicated region
    $region45: #{tpu_custom_call.1} parent=5 // pred_check
      _
    $region46: #{tpu_custom_call.1} parent=5 // pred_check_branch
      %241 = sbr.rel (%p238) target = $region48
    $region47: #{tpu_custom_call.1} parent=5 // pred_region
      %s242 = ssub.s32 %s13, 1
      %p243 = scmp.lt.s32.totalorder %s18, 1
      %s244 = scalar_select %p243, %s18, 1
      %s245 = smul.addr %s244, 32
      %s246 = smul.addr %s245, 8
      %s247 = scalar_lea.vmem %s0, %s246
      %p248 = pneg %p39
      %p249 = pneg %p36
      %p250 = pneg %p60
      %p251 = pneg %p57
      %p252 = pneg %p81
      %p253 = pneg %p78
      %p254 = pneg %p102
      %p255 = pneg %p99
      %p256 = pneg %p123
      %p257 = pneg %p120
      %p258 = pneg %p144
      %p259 = pneg %p141
      %p260 = pneg %p165
      %p261 = pneg %p162
      %p262 = pneg %p191
      %p263 = pneg %p188
      %p264 = scmp.lt.s32.totalorder %s18, 1
      %s265 = scalar_select %p264, %s18, 1
      %s266 = smul.addr %s265, 32
      %s267 = smul.addr %s266, 8
      %s268 = scalar_lea.vmem %s7, %s267
      %p269 = scmp.lt.s32.totalorder %s18, 1
      %s270 = scalar_select %p269, %s18, 1
      %s271 = smul.addr %s270, 32
      %s272 = smul.addr %s271, 8
      %s273 = scalar_lea.vmem %s0, %s272
      %p274 = scmp.lt.s32.totalorder %s18, 1
      %s275 = scalar_select %p274, %s18, 1
      %s276 = smul.addr %s275, 32
      %s277 = smul.addr %s276, 8
      %s278 = scalar_lea.vmem %s7, %s277
      %vm279 = vcmask 31744
      %280 = vst.msk [vmem:[#allocation2] sm:$0xff] %vm279, 0.0
      %281 = vst.msk [vmem:[#allocation2 + $0x8] sm:$0xff] %vm279, 0.0
      %vm282 = vcmask 25600
      %283 = vst.msk [vmem:[#allocation2 + $0x10] sm:$0x3] %vm282, 0.0
      %284 = vst.msk [vmem:[#allocation2 + $0x18] sm:$0xff] %vm279, 0.0
      %285 = vst.msk [vmem:[#allocation2 + $0x20] sm:$0xff] %vm279, 0.0
      %286 = vst.msk [vmem:[#allocation2 + $0x28] sm:$0x3] %vm282, 0.0
      %287 = vst.msk [vmem:[#allocation2 + $0x30] sm:$0xff] %vm279, 0.0
      %288 = vst.msk [vmem:[#allocation2 + $0x38] sm:$0xff] %vm279, 0.0
      %289 = vst.msk [vmem:[#allocation2 + $0x40] sm:$0x3] %vm282, 0.0
      %290 = vst.msk [vmem:[#allocation2 + $0x48] sm:$0xff] %vm279, 0.0
      %291 = vst.msk [vmem:[#allocation2 + $0x50] sm:$0xff] %vm279, 0.0
      %292 = vst.msk [vmem:[#allocation2 + $0x58] sm:$0x3] %vm282, 0.0
      %293 = vst.msk [vmem:[#allocation2 + $0x60] sm:$0xff] %vm279, 0.0
      %294 = vst.msk [vmem:[#allocation2 + $0x68] sm:$0xff] %vm279, 0.0
      %295 = vst.msk [vmem:[#allocation2 + $0x70] sm:$0x3] %vm282, 0.0
      %296 = vst.msk [vmem:[#allocation2 + $0x78] sm:$0xff] %vm279, 0.0
      %297 = vst.msk [vmem:[#allocation2 + $0x80] sm:$0xff] %vm279, 0.0
      %298 = vst.msk [vmem:[#allocation2 + $0x88] sm:$0x3] %vm282, 0.0
      %299 = vst.msk [vmem:[#allocation2 + $0x90] sm:$0xff] %vm279, 0.0
      %300 = vst.msk [vmem:[#allocation2 + $0x98] sm:$0xff] %vm279, 0.0
      %301 = vst.msk [vmem:[#allocation2 + $0xa0] sm:$0x3] %vm282, 0.0
      %302 = vst.msk [vmem:[#allocation2 + $0xa8] sm:$0xff] %vm279, 0.0
      %303 = vst.msk [vmem:[#allocation2 + $0xb0] sm:$0xff] %vm279, 0.0
      %304 = vst.msk [vmem:[#allocation2 + $0xb8] sm:$0x3] %vm282, 0.0
      %305 = vst.msk [vmem:[#allocation2 + $0xc0] sm:$0xff] %vm279, 0.0
      %306 = vst.msk [vmem:[#allocation2 + $0xc8] sm:$0xff] %vm279, 0.0
      %307 = vst.msk [vmem:[#allocation2 + $0xd0] sm:$0x3] %vm282, 0.0
      %308 = vst.msk [vmem:[#allocation2 + $0xd8] sm:$0xff] %vm279, 0.0
      %309 = vst.msk [vmem:[#allocation2 + $0xe0] sm:$0xff] %vm279, 0.0
      %310 = vst.msk [vmem:[#allocation2 + $0xe8] sm:$0x3] %vm282, 0.0
      %311 = vst.msk [vmem:[#allocation2 + $0xf0] sm:$0xff] %vm279, 0.0
      %312 = vst.msk [vmem:[#allocation2 + $0xf8] sm:$0xff] %vm279, 0.0
      %313 = vst.msk [vmem:[#allocation2 + $0x100] sm:$0x3] %vm282, 0.0
      %314 = vst.msk [vmem:[#allocation2 + $0x108] sm:$0xff] %vm279, 0.0
      %315 = vst.msk [vmem:[#allocation2 + $0x110] sm:$0xff] %vm279, 0.0
      %316 = vst.msk [vmem:[#allocation2 + $0x118] sm:$0x3] %vm282, 0.0
      %317 = vst.msk [vmem:[#allocation2 + $0x120] sm:$0xff] %vm279, 0.0
      %318 = vst.msk [vmem:[#allocation2 + $0x128] sm:$0xff] %vm279, 0.0
      %319 = vst.msk [vmem:[#allocation2 + $0x130] sm:$0x3] %vm282, 0.0
      %320 = vst.msk [vmem:[#allocation2 + $0x138] sm:$0xff] %vm279, 0.0
      %321 = vst.msk [vmem:[#allocation2 + $0x140] sm:$0xff] %vm279, 0.0
      %322 = vst.msk [vmem:[#allocation2 + $0x148] sm:$0x3] %vm282, 0.0
      %323 = vst.msk [vmem:[#allocation2 + $0x150] sm:$0xff] %vm279, 0.0
      %324 = vst.msk [vmem:[#allocation2 + $0x158] sm:$0xff] %vm279, 0.0
      %325 = vst.msk [vmem:[#allocation2 + $0x160] sm:$0x3] %vm282, 0.0
      %326 = vst.msk [vmem:[#allocation2 + $0x168] sm:$0xff] %vm279, 0.0
      %327 = vst.msk [vmem:[#allocation2 + $0x170] sm:$0xff] %vm279, 0.0
      %328 = vst.msk [vmem:[#allocation2 + $0x178] sm:$0x3] %vm282, 0.0
      %329 = vst.msk [vmem:[#allocation2 + $0x180] sm:$0xff] %vm279, 0.0
      %330 = vst.msk [vmem:[#allocation2 + $0x188] sm:$0xff] %vm279, 0.0
      %331 = vst.msk [vmem:[#allocation2 + $0x190] sm:$0x3] %vm282, 0.0
      %332 = vst.msk [vmem:[#allocation2 + $0x198] sm:$0xff] %vm279, 0.0
      %333 = vst.msk [vmem:[#allocation2 + $0x1a0] sm:$0xff] %vm279, 0.0
      %334 = vst.msk [vmem:[#allocation2 + $0x1a8] sm:$0x3] %vm282, 0.0
      %v335 = vld [vmem:[%s273] sm:$0xff]
      %v336 = vld [vmem:[%s273 + $0x8] sm:$0xff]
      %v337 = vld [vmem:[%s273 + $0x10] sm:$0xff]
      %v338 = vld [vmem:[%s273 + $0x18] sm:$0xff]
      %v339 = vld [vmem:[%s273 + $0x20] sm:$0xff]
      %v340 = vld [vmem:[%s273 + $0x28] sm:$0xff]
      %v341 = vld [vmem:[%s273 + $0x30] sm:$0xff]
      %v342 = vld [vmem:[%s273 + $0x38] sm:$0xff]
      %v343 = vld [vmem:[%s273 + $0x40] sm:$0xff]
      %v344 = vld [vmem:[%s273 + $0x48] sm:$0xff]
      %v345 = vld [vmem:[%s273 + $0x50] sm:$0xff]
      %v346 = vld [vmem:[%s273 + $0x58] sm:$0xff]
      %v347 = vld [vmem:[%s273 + $0x60] sm:$0xff]
      %v348 = vld [vmem:[%s273 + $0x68] sm:$0xff]
      %v349 = vld [vmem:[%s273 + $0x70] sm:$0xff]
      %v350 = vld [vmem:[%s273 + $0x78] sm:$0xff]
      %v351 = vld [vmem:[%s273 + $0x80] sm:$0xff]
      %v352 = vld [vmem:[%s273 + $0x88] sm:$0xff]
      %v353 = vld [vmem:[%s273 + $0x90] sm:$0xff]
      %v354 = vld [vmem:[%s273 + $0x98] sm:$0xff]
      %v355 = vld [vmem:[%s273 + $0xa0] sm:$0xff]
      %v356 = vld [vmem:[%s273 + $0xa8] sm:$0xff]
      %v357 = vld [vmem:[%s273 + $0xb0] sm:$0xff]
      %v358 = vld [vmem:[%s273 + $0xb8] sm:$0xff]
      %v359 = vld [vmem:[%s273 + $0xc0] sm:$0xff]
      %v360 = vld [vmem:[%s273 + $0xc8] sm:$0xff]
      %v361 = vld [vmem:[%s273 + $0xd0] sm:$0xff]
      %v362 = vld [vmem:[%s273 + $0xd8] sm:$0xff]
      %v363 = vld [vmem:[%s273 + $0xe0] sm:$0xff]
      %v364 = vld [vmem:[%s273 + $0xe8] sm:$0xff]
      %v365 = vld [vmem:[%s273 + $0xf0] sm:$0xff]
      %v366 = vld [vmem:[%s273 + $0xf8] sm:$0xff]
      %v367 = vld [vmem:[%s1] sm:$0xff]
      %v368 = vld [vmem:[%s2] sm:$0x1]
      %v370 = vperm.slane %v368, 0
      %vm372 = vcmask 64512
      %v374 = vsel %vm372, %v335, 0
      %v377 = vsel %vm372, %v336, 0
      %v380 = vsel %vm372, %v337, 0
      %v383 = vsel %vm372, %v338, 0
      %v386 = vsel %vm372, %v339, 0
      %v389 = vsel %vm372, %v340, 0
      %v392 = vsel %vm372, %v341, 0
      %v395 = vsel %vm372, %v342, 0
      %v398 = vsel %vm372, %v343, 0
      %v401 = vsel %vm372, %v344, 0
      %v404 = vsel %vm372, %v345, 0
      %v407 = vsel %vm372, %v346, 0
      %v410 = vsel %vm372, %v347, 0
      %v413 = vsel %vm372, %v348, 0
      %v416 = vsel %vm372, %v349, 0
      %v419 = vsel %vm372, %v350, 0
      %v422 = vsel %vm372, %v351, 0
      %v425 = vsel %vm372, %v352, 0
      %v428 = vsel %vm372, %v353, 0
      %v431 = vsel %vm372, %v354, 0
      %v434 = vsel %vm372, %v355, 0
      %v437 = vsel %vm372, %v356, 0
      %v440 = vsel %vm372, %v357, 0
      %v443 = vsel %vm372, %v358, 0
      %v446 = vsel %vm372, %v359, 0
      %v449 = vsel %vm372, %v360, 0
      %v452 = vsel %vm372, %v361, 0
      %v455 = vsel %vm372, %v362, 0
      %v458 = vsel %vm372, %v363, 0
      %v461 = vsel %vm372, %v364, 0
      %v464 = vsel %vm372, %v365, 0
      %v467 = vsel %vm372, %v366, 0
      %469 = vmatpush.msra.mxu0 0.0
      %470 = vmatpush.msra.mxu0 0.0
      %471 = vmatpush.msra.mxu0 0.0
      %472 = vmatpush.msra.mxu0 0.0
      %473 = vmatpush.msra.mxu0 0.0
      %474 = vmatpush.msra.mxu0 0.0
      %475 = vmatpush.msra.mxu0 0.0
      %476 = vmatpush.msra.mxu0 0.0
      %477 = vmatpush.msra.mxu0 0.0
      %478 = vmatpush.msra.mxu0 0.0
      %479 = vmatpush.msra.mxu0 0.0
      %480 = vmatpush.msra.mxu0 0.0
      %481 = vmatpush.msra.mxu0 0.0
      %482 = vmatpush.msra.mxu0 0.0
      %483 = vmatpush.msra.mxu0 0.0
      %484 = vmatpush.msra.mxu0 %v367
      %485 = vmatmul.f32.gmra.mxu0 %v374
      %v486 = vpop.f32.mrf.mxu0
      %v487 = vadd.f32 %v370, %v486
      %488 = vmatmul.f32.gmra.mxu0 %v377
      %v489 = vpop.f32.mrf.mxu0
      %v490 = vadd.f32 %v370, %v489
      %491 = vmatmul.f32.gmra.mxu0 %v380
      %v492 = vpop.f32.mrf.mxu0
      %v493 = vadd.f32 %v370, %v492
      %494 = vmatmul.f32.gmra.mxu0 %v383
      %v495 = vpop.f32.mrf.mxu0
      %v496 = vadd.f32 %v370, %v495
      %497 = vmatmul.f32.gmra.mxu0 %v386
      %v498 = vpop.f32.mrf.mxu0
      %v499 = vadd.f32 %v370, %v498
      %500 = vmatmul.f32.gmra.mxu0 %v389
      %v501 = vpop.f32.mrf.mxu0
      %v502 = vadd.f32 %v370, %v501
      %503 = vmatmul.f32.gmra.mxu0 %v392
      %v504 = vpop.f32.mrf.mxu0
      %v505 = vadd.f32 %v370, %v504
      %506 = vmatmul.f32.gmra.mxu0 %v395
      %v507 = vpop.f32.mrf.mxu0
      %v508 = vadd.f32 %v370, %v507
      %509 = vmatmul.f32.gmra.mxu0 %v398
      %v510 = vpop.f32.mrf.mxu0
      %v511 = vadd.f32 %v370, %v510
      %512 = vmatmul.f32.gmra.mxu0 %v401
      %v513 = vpop.f32.mrf.mxu0
      %v514 = vadd.f32 %v370, %v513
      %515 = vmatmul.f32.gmra.mxu0 %v404
      %v516 = vpop.f32.mrf.mxu0
      %v517 = vadd.f32 %v370, %v516
      %518 = vmatmul.f32.gmra.mxu0 %v407
      %v519 = vpop.f32.mrf.mxu0
      %v520 = vadd.f32 %v370, %v519
      %521 = vmatmul.f32.gmra.mxu0 %v410
      %v522 = vpop.f32.mrf.mxu0
      %v523 = vadd.f32 %v370, %v522
      %524 = vmatmul.f32.gmra.mxu0 %v413
      %v525 = vpop.f32.mrf.mxu0
      %v526 = vadd.f32 %v370, %v525
      %527 = vmatmul.f32.gmra.mxu0 %v416
      %v528 = vpop.f32.mrf.mxu0
      %v529 = vadd.f32 %v370, %v528
      %530 = vmatmul.f32.gmra.mxu0 %v419
      %v531 = vpop.f32.mrf.mxu0
      %v532 = vadd.f32 %v370, %v531
      %533 = vmatmul.f32.gmra.mxu0 %v422
      %v534 = vpop.f32.mrf.mxu0
      %v535 = vadd.f32 %v370, %v534
      %536 = vmatmul.f32.gmra.mxu0 %v425
      %v537 = vpop.f32.mrf.mxu0
      %v538 = vadd.f32 %v370, %v537
      %539 = vmatmul.f32.gmra.mxu0 %v428
      %v540 = vpop.f32.mrf.mxu0
      %v541 = vadd.f32 %v370, %v540
      %542 = vmatmul.f32.gmra.mxu0 %v431
      %v543 = vpop.f32.mrf.mxu0
      %v544 = vadd.f32 %v370, %v543
      %545 = vmatmul.f32.gmra.mxu0 %v434
      %v546 = vpop.f32.mrf.mxu0
      %v547 = vadd.f32 %v370, %v546
      %548 = vmatmul.f32.gmra.mxu0 %v437
      %v549 = vpop.f32.mrf.mxu0
      %v550 = vadd.f32 %v370, %v549
      %551 = vmatmul.f32.gmra.mxu0 %v440
      %v552 = vpop.f32.mrf.mxu0
      %v553 = vadd.f32 %v370, %v552
      %554 = vmatmul.f32.gmra.mxu0 %v443
      %v555 = vpop.f32.mrf.mxu0
      %v556 = vadd.f32 %v370, %v555
      %557 = vmatmul.f32.gmra.mxu0 %v446
      %v558 = vpop.f32.mrf.mxu0
      %v559 = vadd.f32 %v370, %v558
      %560 = vmatmul.f32.gmra.mxu0 %v449
      %v561 = vpop.f32.mrf.mxu0
      %v562 = vadd.f32 %v370, %v561
      %563 = vmatmul.f32.gmra.mxu0 %v452
      %v564 = vpop.f32.mrf.mxu0
      %v565 = vadd.f32 %v370, %v564
      %566 = vmatmul.f32.gmra.mxu0 %v455
      %v567 = vpop.f32.mrf.mxu0
      %v568 = vadd.f32 %v370, %v567
      %569 = vmatmul.f32.gmra.mxu0 %v458
      %v570 = vpop.f32.mrf.mxu0
      %v571 = vadd.f32 %v370, %v570
      %572 = vmatmul.f32.gmra.mxu0 %v461
      %v573 = vpop.f32.mrf.mxu0
      %v574 = vadd.f32 %v370, %v573
      %575 = vmatmul.f32.gmra.mxu0 %v464
      %v576 = vpop.f32.mrf.mxu0
      %v577 = vadd.f32 %v370, %v576
      %578 = vmatmul.f32.gmra.mxu0 %v467
      %v579 = vpop.f32.mrf.mxu0
      %v580 = vadd.f32 %v370, %v579
      %581 = vdwg.mxu0
      %v582 = vmax.f32 %v487, 0.0
      %v583 = vmax.f32 %v490, 0.0
      %v584 = vmax.f32 %v493, 0.0
      %v585 = vmax.f32 %v496, 0.0
      %v586 = vmax.f32 %v499, 0.0
      %v587 = vmax.f32 %v502, 0.0
      %v588 = vmax.f32 %v505, 0.0
      %v589 = vmax.f32 %v508, 0.0
      %v590 = vmax.f32 %v511, 0.0
      %v591 = vmax.f32 %v514, 0.0
      %v592 = vmax.f32 %v517, 0.0
      %v593 = vmax.f32 %v520, 0.0
      %v594 = vmax.f32 %v523, 0.0
      %v595 = vmax.f32 %v526, 0.0
      %v596 = vmax.f32 %v529, 0.0
      %v597 = vmax.f32 %v532, 0.0
      %v598 = vmax.f32 %v535, 0.0
      %v599 = vmax.f32 %v538, 0.0
      %v600 = vmax.f32 %v541, 0.0
      %v601 = vmax.f32 %v544, 0.0
      %v602 = vmax.f32 %v547, 0.0
      %v603 = vmax.f32 %v550, 0.0
      %v604 = vmax.f32 %v553, 0.0
      %v605 = vmax.f32 %v556, 0.0
      %v606 = vmax.f32 %v559, 0.0
      %v607 = vmax.f32 %v562, 0.0
      %v608 = vmax.f32 %v565, 0.0
      %v609 = vmax.f32 %v568, 0.0
      %v610 = vmax.f32 %v571, 0.0
      %v611 = vmax.f32 %v574, 0.0
      %v612 = vmax.f32 %v577, 0.0
      %v613 = vmax.f32 %v580, 0.0
      %s614 = scalar_lea.vmem [#allocation2], 24
      %615 = vst.msk [vmem:[%s614 + $0x1] sm:$0xff] %vm279, %v582
      %616 = vst.msk [vmem:[%s614 + $0x9] sm:$0xff] %vm279, %v583
      %617 = vst.msk [vmem:[%s614 + $0x19] sm:$0xff] %vm279, %v584
      %618 = vst.msk [vmem:[%s614 + $0x21] sm:$0xff] %vm279, %v585
      %619 = vst.msk [vmem:[%s614 + $0x31] sm:$0xff] %vm279, %v586
      %620 = vst.msk [vmem:[%s614 + $0x39] sm:$0xff] %vm279, %v587
      %621 = vst.msk [vmem:[%s614 + $0x49] sm:$0xff] %vm279, %v588
      %622 = vst.msk [vmem:[%s614 + $0x51] sm:$0xff] %vm279, %v589
      %623 = vst.msk [vmem:[%s614 + $0x61] sm:$0xff] %vm279, %v590
      %624 = vst.msk [vmem:[%s614 + $0x69] sm:$0xff] %vm279, %v591
      %625 = vst.msk [vmem:[%s614 + $0x79] sm:$0xff] %vm279, %v592
      %626 = vst.msk [vmem:[%s614 + $0x81] sm:$0xff] %vm279, %v593
      %627 = vst.msk [vmem:[%s614 + $0x91] sm:$0xff] %vm279, %v594
      %628 = vst.msk [vmem:[%s614 + $0x99] sm:$0xff] %vm279, %v595
      %629 = vst.msk [vmem:[%s614 + $0xa9] sm:$0xff] %vm279, %v596
      %630 = vst.msk [vmem:[%s614 + $0xb1] sm:$0xff] %vm279, %v597
      %631 = vst.msk [vmem:[%s614 + $0xc1] sm:$0xff] %vm279, %v598
      %632 = vst.msk [vmem:[%s614 + $0xc9] sm:$0xff] %vm279, %v599
      %633 = vst.msk [vmem:[%s614 + $0xd9] sm:$0xff] %vm279, %v600
      %634 = vst.msk [vmem:[%s614 + $0xe1] sm:$0xff] %vm279, %v601
      %635 = vst.msk [vmem:[%s614 + $0xf1] sm:$0xff] %vm279, %v602
      %636 = vst.msk [vmem:[%s614 + $0xf9] sm:$0xff] %vm279, %v603
      %637 = vst.msk [vmem:[%s614 + $0x109] sm:$0xff] %vm279, %v604
      %638 = vst.msk [vmem:[%s614 + $0x111] sm:$0xff] %vm279, %v605
      %639 = vst.msk [vmem:[%s614 + $0x121] sm:$0xff] %vm279, %v606
      %640 = vst.msk [vmem:[%s614 + $0x129] sm:$0xff] %vm279, %v607
      %641 = vst.msk [vmem:[%s614 + $0x139] sm:$0xff] %vm279, %v608
      %642 = vst.msk [vmem:[%s614 + $0x141] sm:$0xff] %vm279, %v609
      %643 = vst.msk [vmem:[%s614 + $0x151] sm:$0xff] %vm279, %v610
      %644 = vst.msk [vmem:[%s614 + $0x159] sm:$0xff] %vm279, %v611
      %645 = vst.msk [vmem:[%s614 + $0x169] sm:$0xff] %vm279, %v612
      %646 = vst.msk [vmem:[%s614 + $0x171] sm:$0xff] %vm279, %v613
      %v647 = vld [vmem:[%s3] sm:$0xff]
      %v648 = vld [vmem:[%s3 + $0x8] sm:$0x1]
      %v649 = vld [vmem:[%s4] sm:$0x1]
      %v651 = vperm.slane %v649, 0
      %v653 = vadd.f32 %v651, 0.0
      %v654 = vld [vmem:[#allocation2] sm:$0xff]
      %v655 = vld [vmem:[#allocation2 + $0x8] sm:$0xff]
      %v656 = vld [vmem:[#allocation2 + $0x18] sm:$0xff]
      %v657 = vld [vmem:[#allocation2 + $0x20] sm:$0xff]
      %v658 = vld [vmem:[#allocation2 + $0x30] sm:$0xff]
      %v659 = vld [vmem:[#allocation2 + $0x38] sm:$0xff]
      %v660 = vld [vmem:[#allocation2 + $0x48] sm:$0xff]
      %v661 = vld [vmem:[#allocation2 + $0x50] sm:$0xff]
      %v662 = vld [vmem:[#allocation2 + $0x60] sm:$0xff]
      %v663 = vld [vmem:[#allocation2 + $0x68] sm:$0xff]
      %v664 = vld [vmem:[#allocation2 + $0x78] sm:$0xff]
      %v665 = vld [vmem:[#allocation2 + $0x80] sm:$0xff]
      %v666 = vld [vmem:[#allocation2 + $0x90] sm:$0xff]
      %v667 = vld [vmem:[#allocation2 + $0x98] sm:$0xff]
      %v668 = vld [vmem:[#allocation2 + $0xa8] sm:$0xff]
      %v669 = vld [vmem:[#allocation2 + $0xb0] sm:$0xff]
      %v670 = vld [vmem:[#allocation2 + $0xc0] sm:$0xff]
      %v671 = vld [vmem:[#allocation2 + $0xc8] sm:$0xff]
      %v672 = vld [vmem:[#allocation2 + $0xd8] sm:$0xff]
      %v673 = vld [vmem:[#allocation2 + $0xe0] sm:$0xff]
      %v674 = vld [vmem:[#allocation2 + $0xf0] sm:$0xff]
      %v675 = vld [vmem:[#allocation2 + $0xf8] sm:$0xff]
      %v676 = vld [vmem:[#allocation2 + $0x108] sm:$0xff]
      %v677 = vld [vmem:[#allocation2 + $0x110] sm:$0xff]
      %v678 = vld [vmem:[#allocation2 + $0x120] sm:$0xff]
      %v679 = vld [vmem:[#allocation2 + $0x128] sm:$0xff]
      %v680 = vld [vmem:[#allocation2 + $0x138] sm:$0xff]
      %v681 = vld [vmem:[#allocation2 + $0x140] sm:$0xff]
      %v682 = vld [vmem:[#allocation2 + $0x150] sm:$0xff]
      %v683 = vld [vmem:[#allocation2 + $0x158] sm:$0xff]
      %v684 = vld [vmem:[#allocation2 + $0x168] sm:$0xff]
      %v685 = vld [vmem:[#allocation2 + $0x170] sm:$0xff]
      %v686 = vperm.slane %v647, 0
      %v687 = vmul.f32 %v654, %v686
      %v688 = vmul.f32 %v655, %v686
      %v689 = vmul.f32 %v656, %v686
      %v690 = vmul.f32 %v657, %v686
      %v691 = vmul.f32 %v658, %v686
      %v692 = vmul.f32 %v659, %v686
      %v693 = vmul.f32 %v660, %v686
      %v694 = vmul.f32 %v661, %v686
      %v695 = vmul.f32 %v662, %v686
      %v696 = vmul.f32 %v663, %v686
      %v697 = vmul.f32 %v664, %v686
      %v698 = vmul.f32 %v665, %v686
      %v699 = vmul.f32 %v666, %v686
      %v700 = vmul.f32 %v667, %v686
      %v701 = vmul.f32 %v668, %v686
      %v702 = vmul.f32 %v669, %v686
      %v703 = vmul.f32 %v670, %v686
      %v704 = vmul.f32 %v671, %v686
      %v705 = vmul.f32 %v672, %v686
      %v706 = vmul.f32 %v673, %v686
      %v707 = vmul.f32 %v674, %v686
      %v708 = vmul.f32 %v675, %v686
      %v709 = vmul.f32 %v676, %v686
      %v710 = vmul.f32 %v677, %v686
      %v711 = vmul.f32 %v678, %v686
      %v712 = vmul.f32 %v679, %v686
      %v713 = vmul.f32 %v680, %v686
      %v714 = vmul.f32 %v681, %v686
      %v715 = vmul.f32 %v682, %v686
      %v716 = vmul.f32 %v683, %v686
      %v717 = vmul.f32 %v684, %v686
      %v718 = vmul.f32 %v685, %v686
      %v719 = vadd.f32 %v653, %v687
      %v720 = vadd.f32 %v653, %v688
      %v721 = vadd.f32 %v653, %v689
      %v722 = vadd.f32 %v653, %v690
      %v723 = vadd.f32 %v653, %v691
      %v724 = vadd.f32 %v653, %v692
      %v725 = vadd.f32 %v653, %v693
      %v726 = vadd.f32 %v653, %v694
      %v727 = vadd.f32 %v653, %v695
      %v728 = vadd.f32 %v653, %v696
      %v729 = vadd.f32 %v653, %v697
      %v730 = vadd.f32 %v653, %v698
      %v731 = vadd.f32 %v653, %v699
      %v732 = vadd.f32 %v653, %v700
      %v733 = vadd.f32 %v653, %v701
      %v734 = vadd.f32 %v653, %v702
      %v735 = vadd.f32 %v653, %v703
      %v736 = vadd.f32 %v653, %v704
      %v737 = vadd.f32 %v653, %v705
      %v738 = vadd.f32 %v653, %v706
      %v739 = vadd.f32 %v653, %v707
      %v740 = vadd.f32 %v653, %v708
      %v741 = vadd.f32 %v653, %v709
      %v742 = vadd.f32 %v653, %v710
      %v743 = vadd.f32 %v653, %v711
      %v744 = vadd.f32 %v653, %v712
      %v745 = vadd.f32 %v653, %v713
      %v746 = vadd.f32 %v653, %v714
      %v747 = vadd.f32 %v653, %v715
      %v748 = vadd.f32 %v653, %v716
      %v749 = vadd.f32 %v653, %v717
      %v750 = vadd.f32 %v653, %v718
      %v751 = vld [vmem:[#allocation2 + $0x1] sm:$0xff]
      %v752 = vld [vmem:[#allocation2 + $0x9] sm:$0xff]
      %v753 = vld [vmem:[#allocation2 + $0x19] sm:$0xff]
      %v754 = vld [vmem:[#allocation2 + $0x21] sm:$0xff]
      %v755 = vld [vmem:[#allocation2 + $0x31] sm:$0xff]
      %v756 = vld [vmem:[#allocation2 + $0x39] sm:$0xff]
      %v757 = vld [vmem:[#allocation2 + $0x49] sm:$0xff]
      %v758 = vld [vmem:[#allocation2 + $0x51] sm:$0xff]
      %v759 = vld [vmem:[#allocation2 + $0x61] sm:$0xff]
      %v760 = vld [vmem:[#allocation2 + $0x69] sm:$0xff]
      %v761 = vld [vmem:[#allocation2 + $0x79] sm:$0xff]
      %v762 = vld [vmem:[#allocation2 + $0x81] sm:$0xff]
      %v763 = vld [vmem:[#allocation2 + $0x91] sm:$0xff]
      %v764 = vld [vmem:[#allocation2 + $0x99] sm:$0xff]
      %v765 = vld [vmem:[#allocation2 + $0xa9] sm:$0xff]
      %v766 = vld [vmem:[#allocation2 + $0xb1] sm:$0xff]
      %v767 = vld [vmem:[#allocation2 + $0xc1] sm:$0xff]
      %v768 = vld [vmem:[#allocation2 + $0xc9] sm:$0xff]
      %v769 = vld [vmem:[#allocation2 + $0xd9] sm:$0xff]
      %v770 = vld [vmem:[#allocation2 + $0xe1] sm:$0xff]
      %v771 = vld [vmem:[#allocation2 + $0xf1] sm:$0xff]
      %v772 = vld [vmem:[#allocation2 + $0xf9] sm:$0xff]
      %v773 = vld [vmem:[#allocation2 + $0x109] sm:$0xff]
      %v774 = vld [vmem:[#allocation2 + $0x111] sm:$0xff]
      %v775 = vld [vmem:[#allocation2 + $0x121] sm:$0xff]
      %v776 = vld [vmem:[#allocation2 + $0x129] sm:$0xff]
      %v777 = vld [vmem:[#allocation2 + $0x139] sm:$0xff]
      %v778 = vld [vmem:[#allocation2 + $0x141] sm:$0xff]
      %v779 = vld [vmem:[#allocation2 + $0x151] sm:$0xff]
      %v780 = vld [vmem:[#allocation2 + $0x159] sm:$0xff]
      %v781 = vld [vmem:[#allocation2 + $0x169] sm:$0xff]
      %v782 = vld [vmem:[#allocation2 + $0x171] sm:$0xff]
      %v783 = vperm.slane %v647, 1
      %v784 = vmul.f32 %v751, %v783
      %v785 = vmul.f32 %v752, %v783
      %v786 = vmul.f32 %v753, %v783
      %v787 = vmul.f32 %v754, %v783
      %v788 = vmul.f32 %v755, %v783
      %v789 = vmul.f32 %v756, %v783
      %v790 = vmul.f32 %v757, %v783
      %v791 = vmul.f32 %v758, %v783
      %v792 = vmul.f32 %v759, %v783
      %v793 = vmul.f32 %v760, %v783
      %v794 = vmul.f32 %v761, %v783
      %v795 = vmul.f32 %v762, %v783
      %v796 = vmul.f32 %v763, %v783
      %v797 = vmul.f32 %v764, %v783
      %v798 = vmul.f32 %v765, %v783
      %v799 = vmul.f32 %v766, %v783
      %v800 = vmul.f32 %v767, %v783
      %v801 = vmul.f32 %v768, %v783
      %v802 = vmul.f32 %v769, %v783
      %v803 = vmul.f32 %v770, %v783
      %v804 = vmul.f32 %v771, %v783
      %v805 = vmul.f32 %v772, %v783
      %v806 = vmul.f32 %v773, %v783
      %v807 = vmul.f32 %v774, %v783
      %v808 = vmul.f32 %v775, %v783
      %v809 = vmul.f32 %v776, %v783
      %v810 = vmul.f32 %v777, %v783
      %v811 = vmul.f32 %v778, %v783
      %v812 = vmul.f32 %v779, %v783
      %v813 = vmul.f32 %v780, %v783
      %v814 = vmul.f32 %v781, %v783
      %v815 = vmul.f32 %v782, %v783
      %v816 = vadd.f32 %v719, %v784
      %v817 = vadd.f32 %v720, %v785
      %v818 = vadd.f32 %v721, %v786
      %v819 = vadd.f32 %v722, %v787
      %v820 = vadd.f32 %v723, %v788
      %v821 = vadd.f32 %v724, %v789
      %v822 = vadd.f32 %v725, %v790
      %v823 = vadd.f32 %v726, %v791
      %v824 = vadd.f32 %v727, %v792
      %v825 = vadd.f32 %v728, %v793
      %v826 = vadd.f32 %v729, %v794
      %v827 = vadd.f32 %v730, %v795
      %v828 = vadd.f32 %v731, %v796
      %v829 = vadd.f32 %v732, %v797
      %v830 = vadd.f32 %v733, %v798
      %v831 = vadd.f32 %v734, %v799
      %v832 = vadd.f32 %v735, %v800
      %v833 = vadd.f32 %v736, %v801
      %v834 = vadd.f32 %v737, %v802
      %v835 = vadd.f32 %v738, %v803
      %v836 = vadd.f32 %v739, %v804
      %v837 = vadd.f32 %v740, %v805
      %v838 = vadd.f32 %v741, %v806
      %v839 = vadd.f32 %v742, %v807
      %v840 = vadd.f32 %v743, %v808
      %v841 = vadd.f32 %v744, %v809
      %v842 = vadd.f32 %v745, %v810
      %v843 = vadd.f32 %v746, %v811
      %v844 = vadd.f32 %v747, %v812
      %v845 = vadd.f32 %v748, %v813
      %v846 = vadd.f32 %v749, %v814
      %v847 = vadd.f32 %v750, %v815
      %v848 = vld [vmem:[#allocation2 + $0x2] sm:$0xff]
      %v849 = vld [vmem:[#allocation2 + $0xa] sm:$0xff]
      %v850 = vld [vmem:[#allocation2 + $0x1a] sm:$0xff]
      %v851 = vld [vmem:[#allocation2 + $0x22] sm:$0xff]
      %v852 = vld [vmem:[#allocation2 + $0x32] sm:$0xff]
      %v853 = vld [vmem:[#allocation2 + $0x3a] sm:$0xff]
      %v854 = vld [vmem:[#allocation2 + $0x4a] sm:$0xff]
      %v855 = vld [vmem:[#allocation2 + $0x52] sm:$0xff]
      %v856 = vld [vmem:[#allocation2 + $0x62] sm:$0xff]
      %v857 = vld [vmem:[#allocation2 + $0x6a] sm:$0xff]
      %v858 = vld [vmem:[#allocation2 + $0x7a] sm:$0xff]
      %v859 = vld [vmem:[#allocation2 + $0x82] sm:$0xff]
      %v860 = vld [vmem:[#allocation2 + $0x92] sm:$0xff]
      %v861 = vld [vmem:[#allocation2 + $0x9a] sm:$0xff]
      %v862 = vld [vmem:[#allocation2 + $0xaa] sm:$0xff]
      %v863 = vld [vmem:[#allocation2 + $0xb2] sm:$0xff]
      %v864 = vld [vmem:[#allocation2 + $0xc2] sm:$0xff]
      %v865 = vld [vmem:[#allocation2 + $0xca] sm:$0xff]
      %v866 = vld [vmem:[#allocation2 + $0xda] sm:$0xff]
      %v867 = vld [vmem:[#allocation2 + $0xe2] sm:$0xff]
      %v868 = vld [vmem:[#allocation2 + $0xf2] sm:$0xff]
      %v869 = vld [vmem:[#allocation2 + $0xfa] sm:$0xff]
      %v870 = vld [vmem:[#allocation2 + $0x10a] sm:$0xff]
      %v871 = vld [vmem:[#allocation2 + $0x112] sm:$0xff]
      %v872 = vld [vmem:[#allocation2 + $0x122] sm:$0xff]
      %v873 = vld [vmem:[#allocation2 + $0x12a] sm:$0xff]
      %v874 = vld [vmem:[#allocation2 + $0x13a] sm:$0xff]
      %v875 = vld [vmem:[#allocation2 + $0x142] sm:$0xff]
      %v876 = vld [vmem:[#allocation2 + $0x152] sm:$0xff]
      %v877 = vld [vmem:[#allocation2 + $0x15a] sm:$0xff]
      %v878 = vld [vmem:[#allocation2 + $0x16a] sm:$0xff]
      %v879 = vld [vmem:[#allocation2 + $0x172] sm:$0xff]
      %v880 = vperm.slane %v647, 2
      %v881 = vmul.f32 %v848, %v880
      %v882 = vmul.f32 %v849, %v880
      %v883 = vmul.f32 %v850, %v880
      %v884 = vmul.f32 %v851, %v880
      %v885 = vmul.f32 %v852, %v880
      %v886 = vmul.f32 %v853, %v880
      %v887 = vmul.f32 %v854, %v880
      %v888 = vmul.f32 %v855, %v880
      %v889 = vmul.f32 %v856, %v880
      %v890 = vmul.f32 %v857, %v880
      %v891 = vmul.f32 %v858, %v880
      %v892 = vmul.f32 %v859, %v880
      %v893 = vmul.f32 %v860, %v880
      %v894 = vmul.f32 %v861, %v880
      %v895 = vmul.f32 %v862, %v880
      %v896 = vmul.f32 %v863, %v880
      %v897 = vmul.f32 %v864, %v880
      %v898 = vmul.f32 %v865, %v880
      %v899 = vmul.f32 %v866, %v880
      %v900 = vmul.f32 %v867, %v880
      %v901 = vmul.f32 %v868, %v880
      %v902 = vmul.f32 %v869, %v880
      %v903 = vmul.f32 %v870, %v880
      %v904 = vmul.f32 %v871, %v880
      %v905 = vmul.f32 %v872, %v880
      %v906 = vmul.f32 %v873, %v880
      %v907 = vmul.f32 %v874, %v880
      %v908 = vmul.f32 %v875, %v880
      %v909 = vmul.f32 %v876, %v880
      %v910 = vmul.f32 %v877, %v880
      %v911 = vmul.f32 %v878, %v880
      %v912 = vmul.f32 %v879, %v880
      %v913 = vadd.f32 %v816, %v881
      %v914 = vadd.f32 %v817, %v882
      %v915 = vadd.f32 %v818, %v883
      %v916 = vadd.f32 %v819, %v884
      %v917 = vadd.f32 %v820, %v885
      %v918 = vadd.f32 %v821, %v886
      %v919 = vadd.f32 %v822, %v887
      %v920 = vadd.f32 %v823, %v888
      %v921 = vadd.f32 %v824, %v889
      %v922 = vadd.f32 %v825, %v890
      %v923 = vadd.f32 %v826, %v891
      %v924 = vadd.f32 %v827, %v892
      %v925 = vadd.f32 %v828, %v893
      %v926 = vadd.f32 %v829, %v894
      %v927 = vadd.f32 %v830, %v895
      %v928 = vadd.f32 %v831, %v896
      %v929 = vadd.f32 %v832, %v897
      %v930 = vadd.f32 %v833, %v898
      %v931 = vadd.f32 %v834, %v899
      %v932 = vadd.f32 %v835, %v900
      %v933 = vadd.f32 %v836, %v901
      %v934 = vadd.f32 %v837, %v902
      %v935 = vadd.f32 %v838, %v903
      %v936 = vadd.f32 %v839, %v904
      %v937 = vadd.f32 %v840, %v905
      %v938 = vadd.f32 %v841, %v906
      %v939 = vadd.f32 %v842, %v907
      %v940 = vadd.f32 %v843, %v908
      %v941 = vadd.f32 %v844, %v909
      %v942 = vadd.f32 %v845, %v910
      %v943 = vadd.f32 %v846, %v911
      %v944 = vadd.f32 %v847, %v912
      %v945 = vld [vmem:[%s614] sm:$0xff]
      %v946 = vld [vmem:[%s614 + $0x8] sm:$0xff]
      %v947 = vld [vmem:[%s614 + $0x18] sm:$0xff]
      %v948 = vld [vmem:[%s614 + $0x20] sm:$0xff]
      %v949 = vld [vmem:[%s614 + $0x30] sm:$0xff]
      %v950 = vld [vmem:[%s614 + $0x38] sm:$0xff]
      %v951 = vld [vmem:[%s614 + $0x48] sm:$0xff]
      %v952 = vld [vmem:[%s614 + $0x50] sm:$0xff]
      %v953 = vld [vmem:[%s614 + $0x60] sm:$0xff]
      %v954 = vld [vmem:[%s614 + $0x68] sm:$0xff]
      %v955 = vld [vmem:[%s614 + $0x78] sm:$0xff]
      %v956 = vld [vmem:[%s614 + $0x80] sm:$0xff]
      %v957 = vld [vmem:[%s614 + $0x90] sm:$0xff]
      %v958 = vld [vmem:[%s614 + $0x98] sm:$0xff]
      %v959 = vld [vmem:[%s614 + $0xa8] sm:$0xff]
      %v960 = vld [vmem:[%s614 + $0xb0] sm:$0xff]
      %v961 = vld [vmem:[%s614 + $0xc0] sm:$0xff]
      %v962 = vld [vmem:[%s614 + $0xc8] sm:$0xff]
      %v963 = vld [vmem:[%s614 + $0xd8] sm:$0xff]
      %v964 = vld [vmem:[%s614 + $0xe0] sm:$0xff]
      %v965 = vld [vmem:[%s614 + $0xf0] sm:$0xff]
      %v966 = vld [vmem:[%s614 + $0xf8] sm:$0xff]
      %v967 = vld [vmem:[%s614 + $0x108] sm:$0xff]
      %v968 = vld [vmem:[%s614 + $0x110] sm:$0xff]
      %v969 = vld [vmem:[%s614 + $0x120] sm:$0xff]
      %v970 = vld [vmem:[%s614 + $0x128] sm:$0xff]
      %v971 = vld [vmem:[%s614 + $0x138] sm:$0xff]
      %v972 = vld [vmem:[%s614 + $0x140] sm:$0xff]
      %v973 = vld [vmem:[%s614 + $0x150] sm:$0xff]
      %v974 = vld [vmem:[%s614 + $0x158] sm:$0xff]
      %v975 = vld [vmem:[%s614 + $0x168] sm:$0xff]
      %v976 = vld [vmem:[%s614 + $0x170] sm:$0xff]
      %v977 = vperm.slane %v647, 3
      %v978 = vmul.f32 %v945, %v977
      %v979 = vmul.f32 %v946, %v977
      %v980 = vmul.f32 %v947, %v977
      %v981 = vmul.f32 %v948, %v977
      %v982 = vmul.f32 %v949, %v977
      %v983 = vmul.f32 %v950, %v977
      %v984 = vmul.f32 %v951, %v977
      %v985 = vmul.f32 %v952, %v977
      %v986 = vmul.f32 %v953, %v977
      %v987 = vmul.f32 %v954, %v977
      %v988 = vmul.f32 %v955, %v977
      %v989 = vmul.f32 %v956, %v977
      %v990 = vmul.f32 %v957, %v977
      %v991 = vmul.f32 %v958, %v977
      %v992 = vmul.f32 %v959, %v977
      %v993 = vmul.f32 %v960, %v977
      %v994 = vmul.f32 %v961, %v977
      %v995 = vmul.f32 %v962, %v977
      %v996 = vmul.f32 %v963, %v977
      %v997 = vmul.f32 %v964, %v977
      %v998 = vmul.f32 %v965, %v977
      %v999 = vmul.f32 %v966, %v977
      %v1000 = vmul.f32 %v967, %v977
      %v1001 = vmul.f32 %v968, %v977
      %v1002 = vmul.f32 %v969, %v977
      %v1003 = vmul.f32 %v970, %v977
      %v1004 = vmul.f32 %v971, %v977
      %v1005 = vmul.f32 %v972, %v977
      %v1006 = vmul.f32 %v973, %v977
      %v1007 = vmul.f32 %v974, %v977
      %v1008 = vmul.f32 %v975, %v977
      %v1009 = vmul.f32 %v976, %v977
      %v1010 = vadd.f32 %v913, %v978
      %v1011 = vadd.f32 %v914, %v979
      %v1012 = vadd.f32 %v915, %v980
      %v1013 = vadd.f32 %v916, %v981
      %v1014 = vadd.f32 %v917, %v982
      %v1015 = vadd.f32 %v918, %v983
      %v1016 = vadd.f32 %v919, %v984
      %v1017 = vadd.f32 %v920, %v985
      %v1018 = vadd.f32 %v921, %v986
      %v1019 = vadd.f32 %v922, %v987
      %v1020 = vadd.f32 %v923, %v988
      %v1021 = vadd.f32 %v924, %v989
      %v1022 = vadd.f32 %v925, %v990
      %v1023 = vadd.f32 %v926, %v991
      %v1024 = vadd.f32 %v927, %v992
      %v1025 = vadd.f32 %v928, %v993
      %v1026 = vadd.f32 %v929, %v994
      %v1027 = vadd.f32 %v930, %v995
      %v1028 = vadd.f32 %v931, %v996
      %v1029 = vadd.f32 %v932, %v997
      %v1030 = vadd.f32 %v933, %v998
      %v1031 = vadd.f32 %v934, %v999
      %v1032 = vadd.f32 %v935, %v1000
      %v1033 = vadd.f32 %v936, %v1001
      %v1034 = vadd.f32 %v937, %v1002
      %v1035 = vadd.f32 %v938, %v1003
      %v1036 = vadd.f32 %v939, %v1004
      %v1037 = vadd.f32 %v940, %v1005
      %v1038 = vadd.f32 %v941, %v1006
      %v1039 = vadd.f32 %v942, %v1007
      %v1040 = vadd.f32 %v943, %v1008
      %v1041 = vadd.f32 %v944, %v1009
      %v1042 = vld [vmem:[%s614 + $0x1] sm:$0xff]
      %v1043 = vld [vmem:[%s614 + $0x9] sm:$0xff]
      %v1044 = vld [vmem:[%s614 + $0x19] sm:$0xff]
      %v1045 = vld [vmem:[%s614 + $0x21] sm:$0xff]
      %v1046 = vld [vmem:[%s614 + $0x31] sm:$0xff]
      %v1047 = vld [vmem:[%s614 + $0x39] sm:$0xff]
      %v1048 = vld [vmem:[%s614 + $0x49] sm:$0xff]
      %v1049 = vld [vmem:[%s614 + $0x51] sm:$0xff]
      %v1050 = vld [vmem:[%s614 + $0x61] sm:$0xff]
      %v1051 = vld [vmem:[%s614 + $0x69] sm:$0xff]
      %v1052 = vld [vmem:[%s614 + $0x79] sm:$0xff]
      %v1053 = vld [vmem:[%s614 + $0x81] sm:$0xff]
      %v1054 = vld [vmem:[%s614 + $0x91] sm:$0xff]
      %v1055 = vld [vmem:[%s614 + $0x99] sm:$0xff]
      %v1056 = vld [vmem:[%s614 + $0xa9] sm:$0xff]
      %v1057 = vld [vmem:[%s614 + $0xb1] sm:$0xff]
      %v1058 = vld [vmem:[%s614 + $0xc1] sm:$0xff]
      %v1059 = vld [vmem:[%s614 + $0xc9] sm:$0xff]
      %v1060 = vld [vmem:[%s614 + $0xd9] sm:$0xff]
      %v1061 = vld [vmem:[%s614 + $0xe1] sm:$0xff]
      %v1062 = vld [vmem:[%s614 + $0xf1] sm:$0xff]
      %v1063 = vld [vmem:[%s614 + $0xf9] sm:$0xff]
      %v1064 = vld [vmem:[%s614 + $0x109] sm:$0xff]
      %v1065 = vld [vmem:[%s614 + $0x111] sm:$0xff]
      %v1066 = vld [vmem:[%s614 + $0x121] sm:$0xff]
      %v1067 = vld [vmem:[%s614 + $0x129] sm:$0xff]
      %v1068 = vld [vmem:[%s614 + $0x139] sm:$0xff]
      %v1069 = vld [vmem:[%s614 + $0x141] sm:$0xff]
      %v1070 = vld [vmem:[%s614 + $0x151] sm:$0xff]
      %v1071 = vld [vmem:[%s614 + $0x159] sm:$0xff]
      %v1072 = vld [vmem:[%s614 + $0x169] sm:$0xff]
      %v1073 = vld [vmem:[%s614 + $0x171] sm:$0xff]
      %v1074 = vperm.slane %v647, 4
      %v1075 = vmul.f32 %v1042, %v1074
      %v1076 = vmul.f32 %v1043, %v1074
      %v1077 = vmul.f32 %v1044, %v1074
      %v1078 = vmul.f32 %v1045, %v1074
      %v1079 = vmul.f32 %v1046, %v1074
      %v1080 = vmul.f32 %v1047, %v1074
      %v1081 = vmul.f32 %v1048, %v1074
      %v1082 = vmul.f32 %v1049, %v1074
      %v1083 = vmul.f32 %v1050, %v1074
      %v1084 = vmul.f32 %v1051, %v1074
      %v1085 = vmul.f32 %v1052, %v1074
      %v1086 = vmul.f32 %v1053, %v1074
      %v1087 = vmul.f32 %v1054, %v1074
      %v1088 = vmul.f32 %v1055, %v1074
      %v1089 = vmul.f32 %v1056, %v1074
      %v1090 = vmul.f32 %v1057, %v1074
      %v1091 = vmul.f32 %v1058, %v1074
      %v1092 = vmul.f32 %v1059, %v1074
      %v1093 = vmul.f32 %v1060, %v1074
      %v1094 = vmul.f32 %v1061, %v1074
      %v1095 = vmul.f32 %v1062, %v1074
      %v1096 = vmul.f32 %v1063, %v1074
      %v1097 = vmul.f32 %v1064, %v1074
      %v1098 = vmul.f32 %v1065, %v1074
      %v1099 = vmul.f32 %v1066, %v1074
      %v1100 = vmul.f32 %v1067, %v1074
      %v1101 = vmul.f32 %v1068, %v1074
      %v1102 = vmul.f32 %v1069, %v1074
      %v1103 = vmul.f32 %v1070, %v1074
      %v1104 = vmul.f32 %v1071, %v1074
      %v1105 = vmul.f32 %v1072, %v1074
      %v1106 = vmul.f32 %v1073, %v1074
      %v1107 = vadd.f32 %v1010, %v1075
      %v1108 = vadd.f32 %v1011, %v1076
      %v1109 = vadd.f32 %v1012, %v1077
      %v1110 = vadd.f32 %v1013, %v1078
      %v1111 = vadd.f32 %v1014, %v1079
      %v1112 = vadd.f32 %v1015, %v1080
      %v1113 = vadd.f32 %v1016, %v1081
      %v1114 = vadd.f32 %v1017, %v1082
      %v1115 = vadd.f32 %v1018, %v1083
      %v1116 = vadd.f32 %v1019, %v1084
      %v1117 = vadd.f32 %v1020, %v1085
      %v1118 = vadd.f32 %v1021, %v1086
      %v1119 = vadd.f32 %v1022, %v1087
      %v1120 = vadd.f32 %v1023, %v1088
      %v1121 = vadd.f32 %v1024, %v1089
      %v1122 = vadd.f32 %v1025, %v1090
      %v1123 = vadd.f32 %v1026, %v1091
      %v1124 = vadd.f32 %v1027, %v1092
      %v1125 = vadd.f32 %v1028, %v1093
      %v1126 = vadd.f32 %v1029, %v1094
      %v1127 = vadd.f32 %v1030, %v1095
      %v1128 = vadd.f32 %v1031, %v1096
      %v1129 = vadd.f32 %v1032, %v1097
      %v1130 = vadd.f32 %v1033, %v1098
      %v1131 = vadd.f32 %v1034, %v1099
      %v1132 = vadd.f32 %v1035, %v1100
      %v1133 = vadd.f32 %v1036, %v1101
      %v1134 = vadd.f32 %v1037, %v1102
      %v1135 = vadd.f32 %v1038, %v1103
      %v1136 = vadd.f32 %v1039, %v1104
      %v1137 = vadd.f32 %v1040, %v1105
      %v1138 = vadd.f32 %v1041, %v1106
      %v1139 = vld [vmem:[%s614 + $0x2] sm:$0xff]
      %v1140 = vld [vmem:[%s614 + $0xa] sm:$0xff]
      %v1141 = vld [vmem:[%s614 + $0x1a] sm:$0xff]
      %v1142 = vld [vmem:[%s614 + $0x22] sm:$0xff]
      %v1143 = vld [vmem:[%s614 + $0x32] sm:$0xff]
      %v1144 = vld [vmem:[%s614 + $0x3a] sm:$0xff]
      %v1145 = vld [vmem:[%s614 + $0x4a] sm:$0xff]
      %v1146 = vld [vmem:[%s614 + $0x52] sm:$0xff]
      %v1147 = vld [vmem:[%s614 + $0x62] sm:$0xff]
      %v1148 = vld [vmem:[%s614 + $0x6a] sm:$0xff]
      %v1149 = vld [vmem:[%s614 + $0x7a] sm:$0xff]
      %v1150 = vld [vmem:[%s614 + $0x82] sm:$0xff]
      %v1151 = vld [vmem:[%s614 + $0x92] sm:$0xff]
      %v1152 = vld [vmem:[%s614 + $0x9a] sm:$0xff]
      %v1153 = vld [vmem:[%s614 + $0xaa] sm:$0xff]
      %v1154 = vld [vmem:[%s614 + $0xb2] sm:$0xff]
      %v1155 = vld [vmem:[%s614 + $0xc2] sm:$0xff]
      %v1156 = vld [vmem:[%s614 + $0xca] sm:$0xff]
      %v1157 = vld [vmem:[%s614 + $0xda] sm:$0xff]
      %v1158 = vld [vmem:[%s614 + $0xe2] sm:$0xff]
      %v1159 = vld [vmem:[%s614 + $0xf2] sm:$0xff]
      %v1160 = vld [vmem:[%s614 + $0xfa] sm:$0xff]
      %v1161 = vld [vmem:[%s614 + $0x10a] sm:$0xff]
      %v1162 = vld [vmem:[%s614 + $0x112] sm:$0xff]
      %v1163 = vld [vmem:[%s614 + $0x122] sm:$0xff]
      %v1164 = vld [vmem:[%s614 + $0x12a] sm:$0xff]
      %v1165 = vld [vmem:[%s614 + $0x13a] sm:$0xff]
      %v1166 = vld [vmem:[%s614 + $0x142] sm:$0xff]
      %v1167 = vld [vmem:[%s614 + $0x152] sm:$0xff]
      %v1168 = vld [vmem:[%s614 + $0x15a] sm:$0xff]
      %v1169 = vld [vmem:[%s614 + $0x16a] sm:$0xff]
      %v1170 = vld [vmem:[%s614 + $0x172] sm:$0xff]
      %v1171 = vperm.slane %v647, 5
      %v1172 = vmul.f32 %v1139, %v1171
      %v1173 = vmul.f32 %v1140, %v1171
      %v1174 = vmul.f32 %v1141, %v1171
      %v1175 = vmul.f32 %v1142, %v1171
      %v1176 = vmul.f32 %v1143, %v1171
      %v1177 = vmul.f32 %v1144, %v1171
      %v1178 = vmul.f32 %v1145, %v1171
      %v1179 = vmul.f32 %v1146, %v1171
      %v1180 = vmul.f32 %v1147, %v1171
      %v1181 = vmul.f32 %v1148, %v1171
      %v1182 = vmul.f32 %v1149, %v1171
      %v1183 = vmul.f32 %v1150, %v1171
      %v1184 = vmul.f32 %v1151, %v1171
      %v1185 = vmul.f32 %v1152, %v1171
      %v1186 = vmul.f32 %v1153, %v1171
      %v1187 = vmul.f32 %v1154, %v1171
      %v1188 = vmul.f32 %v1155, %v1171
      %v1189 = vmul.f32 %v1156, %v1171
      %v1190 = vmul.f32 %v1157, %v1171
      %v1191 = vmul.f32 %v1158, %v1171
      %v1192 = vmul.f32 %v1159, %v1171
      %v1193 = vmul.f32 %v1160, %v1171
      %v1194 = vmul.f32 %v1161, %v1171
      %v1195 = vmul.f32 %v1162, %v1171
      %v1196 = vmul.f32 %v1163, %v1171
      %v1197 = vmul.f32 %v1164, %v1171
      %v1198 = vmul.f32 %v1165, %v1171
      %v1199 = vmul.f32 %v1166, %v1171
      %v1200 = vmul.f32 %v1167, %v1171
      %v1201 = vmul.f32 %v1168, %v1171
      %v1202 = vmul.f32 %v1169, %v1171
      %v1203 = vmul.f32 %v1170, %v1171
      %v1204 = vadd.f32 %v1107, %v1172
      %v1205 = vadd.f32 %v1108, %v1173
      %v1206 = vadd.f32 %v1109, %v1174
      %v1207 = vadd.f32 %v1110, %v1175
      %v1208 = vadd.f32 %v1111, %v1176
      %v1209 = vadd.f32 %v1112, %v1177
      %v1210 = vadd.f32 %v1113, %v1178
      %v1211 = vadd.f32 %v1114, %v1179
      %v1212 = vadd.f32 %v1115, %v1180
      %v1213 = vadd.f32 %v1116, %v1181
      %v1214 = vadd.f32 %v1117, %v1182
      %v1215 = vadd.f32 %v1118, %v1183
      %v1216 = vadd.f32 %v1119, %v1184
      %v1217 = vadd.f32 %v1120, %v1185
      %v1218 = vadd.f32 %v1121, %v1186
      %v1219 = vadd.f32 %v1122, %v1187
      %v1220 = vadd.f32 %v1123, %v1188
      %v1221 = vadd.f32 %v1124, %v1189
      %v1222 = vadd.f32 %v1125, %v1190
      %v1223 = vadd.f32 %v1126, %v1191
      %v1224 = vadd.f32 %v1127, %v1192
      %v1225 = vadd.f32 %v1128, %v1193
      %v1226 = vadd.f32 %v1129, %v1194
      %v1227 = vadd.f32 %v1130, %v1195
      %v1228 = vadd.f32 %v1131, %v1196
      %v1229 = vadd.f32 %v1132, %v1197
      %v1230 = vadd.f32 %v1133, %v1198
      %v1231 = vadd.f32 %v1134, %v1199
      %v1232 = vadd.f32 %v1135, %v1200
      %v1233 = vadd.f32 %v1136, %v1201
      %v1234 = vadd.f32 %v1137, %v1202
      %v1235 = vadd.f32 %v1138, %v1203
      %s1236 = scalar_lea.vmem [#allocation2], 48
      %v1237 = vld [vmem:[%s1236] sm:$0xff]
      %v1238 = vld [vmem:[%s1236 + $0x8] sm:$0xff]
      %v1239 = vld [vmem:[%s1236 + $0x18] sm:$0xff]
      %v1240 = vld [vmem:[%s1236 + $0x20] sm:$0xff]
      %v1241 = vld [vmem:[%s1236 + $0x30] sm:$0xff]
      %v1242 = vld [vmem:[%s1236 + $0x38] sm:$0xff]
      %v1243 = vld [vmem:[%s1236 + $0x48] sm:$0xff]
      %v1244 = vld [vmem:[%s1236 + $0x50] sm:$0xff]
      %v1245 = vld [vmem:[%s1236 + $0x60] sm:$0xff]
      %v1246 = vld [vmem:[%s1236 + $0x68] sm:$0xff]
      %v1247 = vld [vmem:[%s1236 + $0x78] sm:$0xff]
      %v1248 = vld [vmem:[%s1236 + $0x80] sm:$0xff]
      %v1249 = vld [vmem:[%s1236 + $0x90] sm:$0xff]
      %v1250 = vld [vmem:[%s1236 + $0x98] sm:$0xff]
      %v1251 = vld [vmem:[%s1236 + $0xa8] sm:$0xff]
      %v1252 = vld [vmem:[%s1236 + $0xb0] sm:$0xff]
      %v1253 = vld [vmem:[%s1236 + $0xc0] sm:$0xff]
      %v1254 = vld [vmem:[%s1236 + $0xc8] sm:$0xff]
      %v1255 = vld [vmem:[%s1236 + $0xd8] sm:$0xff]
      %v1256 = vld [vmem:[%s1236 + $0xe0] sm:$0xff]
      %v1257 = vld [vmem:[%s1236 + $0xf0] sm:$0xff]
      %v1258 = vld [vmem:[%s1236 + $0xf8] sm:$0xff]
      %v1259 = vld [vmem:[%s1236 + $0x108] sm:$0xff]
      %v1260 = vld [vmem:[%s1236 + $0x110] sm:$0xff]
      %v1261 = vld [vmem:[%s1236 + $0x120] sm:$0xff]
      %v1262 = vld [vmem:[%s1236 + $0x128] sm:$0xff]
      %v1263 = vld [vmem:[%s1236 + $0x138] sm:$0xff]
      %v1264 = vld [vmem:[%s1236 + $0x140] sm:$0xff]
      %v1265 = vld [vmem:[%s1236 + $0x150] sm:$0xff]
      %v1266 = vld [vmem:[%s1236 + $0x158] sm:$0xff]
      %v1267 = vld [vmem:[%s1236 + $0x168] sm:$0xff]
      %v1268 = vld [vmem:[%s1236 + $0x170] sm:$0xff]
      %v1269 = vperm.slane %v647, 6
      %v1270 = vmul.f32 %v1237, %v1269
      %v1271 = vmul.f32 %v1238, %v1269
      %v1272 = vmul.f32 %v1239, %v1269
      %v1273 = vmul.f32 %v1240, %v1269
      %v1274 = vmul.f32 %v1241, %v1269
      %v1275 = vmul.f32 %v1242, %v1269
      %v1276 = vmul.f32 %v1243, %v1269
      %v1277 = vmul.f32 %v1244, %v1269
      %v1278 = vmul.f32 %v1245, %v1269
      %v1279 = vmul.f32 %v1246, %v1269
      %v1280 = vmul.f32 %v1247, %v1269
      %v1281 = vmul.f32 %v1248, %v1269
      %v1282 = vmul.f32 %v1249, %v1269
      %v1283 = vmul.f32 %v1250, %v1269
      %v1284 = vmul.f32 %v1251, %v1269
      %v1285 = vmul.f32 %v1252, %v1269
      %v1286 = vmul.f32 %v1253, %v1269
      %v1287 = vmul.f32 %v1254, %v1269
      %v1288 = vmul.f32 %v1255, %v1269
      %v1289 = vmul.f32 %v1256, %v1269
      %v1290 = vmul.f32 %v1257, %v1269
      %v1291 = vmul.f32 %v1258, %v1269
      %v1292 = vmul.f32 %v1259, %v1269
      %v1293 = vmul.f32 %v1260, %v1269
      %v1294 = vmul.f32 %v1261, %v1269
      %v1295 = vmul.f32 %v1262, %v1269
      %v1296 = vmul.f32 %v1263, %v1269
      %v1297 = vmul.f32 %v1264, %v1269
      %v1298 = vmul.f32 %v1265, %v1269
      %v1299 = vmul.f32 %v1266, %v1269
      %v1300 = vmul.f32 %v1267, %v1269
      %v1301 = vmul.f32 %v1268, %v1269
      %v1302 = vadd.f32 %v1204, %v1270
      %v1303 = vadd.f32 %v1205, %v1271
      %v1304 = vadd.f32 %v1206, %v1272
      %v1305 = vadd.f32 %v1207, %v1273
      %v1306 = vadd.f32 %v1208, %v1274
      %v1307 = vadd.f32 %v1209, %v1275
      %v1308 = vadd.f32 %v1210, %v1276
      %v1309 = vadd.f32 %v1211, %v1277
      %v1310 = vadd.f32 %v1212, %v1278
      %v1311 = vadd.f32 %v1213, %v1279
      %v1312 = vadd.f32 %v1214, %v1280
      %v1313 = vadd.f32 %v1215, %v1281
      %v1314 = vadd.f32 %v1216, %v1282
      %v1315 = vadd.f32 %v1217, %v1283
      %v1316 = vadd.f32 %v1218, %v1284
      %v1317 = vadd.f32 %v1219, %v1285
      %v1318 = vadd.f32 %v1220, %v1286
      %v1319 = vadd.f32 %v1221, %v1287
      %v1320 = vadd.f32 %v1222, %v1288
      %v1321 = vadd.f32 %v1223, %v1289
      %v1322 = vadd.f32 %v1224, %v1290
      %v1323 = vadd.f32 %v1225, %v1291
      %v1324 = vadd.f32 %v1226, %v1292
      %v1325 = vadd.f32 %v1227, %v1293
      %v1326 = vadd.f32 %v1228, %v1294
      %v1327 = vadd.f32 %v1229, %v1295
      %v1328 = vadd.f32 %v1230, %v1296
      %v1329 = vadd.f32 %v1231, %v1297
      %v1330 = vadd.f32 %v1232, %v1298
      %v1331 = vadd.f32 %v1233, %v1299
      %v1332 = vadd.f32 %v1234, %v1300
      %v1333 = vadd.f32 %v1235, %v1301
      %v1334 = vld [vmem:[%s1236 + $0x1] sm:$0xff]
      %v1335 = vld [vmem:[%s1236 + $0x9] sm:$0xff]
      %v1336 = vld [vmem:[%s1236 + $0x19] sm:$0xff]
      %v1337 = vld [vmem:[%s1236 + $0x21] sm:$0xff]
      %v1338 = vld [vmem:[%s1236 + $0x31] sm:$0xff]
      %v1339 = vld [vmem:[%s1236 + $0x39] sm:$0xff]
      %v1340 = vld [vmem:[%s1236 + $0x49] sm:$0xff]
      %v1341 = vld [vmem:[%s1236 + $0x51] sm:$0xff]
      %v1342 = vld [vmem:[%s1236 + $0x61] sm:$0xff]
      %v1343 = vld [vmem:[%s1236 + $0x69] sm:$0xff]
      %v1344 = vld [vmem:[%s1236 + $0x79] sm:$0xff]
      %v1345 = vld [vmem:[%s1236 + $0x81] sm:$0xff]
      %v1346 = vld [vmem:[%s1236 + $0x91] sm:$0xff]
      %v1347 = vld [vmem:[%s1236 + $0x99] sm:$0xff]
      %v1348 = vld [vmem:[%s1236 + $0xa9] sm:$0xff]
      %v1349 = vld [vmem:[%s1236 + $0xb1] sm:$0xff]
      %v1350 = vld [vmem:[%s1236 + $0xc1] sm:$0xff]
      %v1351 = vld [vmem:[%s1236 + $0xc9] sm:$0xff]
      %v1352 = vld [vmem:[%s1236 + $0xd9] sm:$0xff]
      %v1353 = vld [vmem:[%s1236 + $0xe1] sm:$0xff]
      %v1354 = vld [vmem:[%s1236 + $0xf1] sm:$0xff]
      %v1355 = vld [vmem:[%s1236 + $0xf9] sm:$0xff]
      %v1356 = vld [vmem:[%s1236 + $0x109] sm:$0xff]
      %v1357 = vld [vmem:[%s1236 + $0x111] sm:$0xff]
      %v1358 = vld [vmem:[%s1236 + $0x121] sm:$0xff]
      %v1359 = vld [vmem:[%s1236 + $0x129] sm:$0xff]
      %v1360 = vld [vmem:[%s1236 + $0x139] sm:$0xff]
      %v1361 = vld [vmem:[%s1236 + $0x141] sm:$0xff]
      %v1362 = vld [vmem:[%s1236 + $0x151] sm:$0xff]
      %v1363 = vld [vmem:[%s1236 + $0x159] sm:$0xff]
      %v1364 = vld [vmem:[%s1236 + $0x169] sm:$0xff]
      %v1365 = vld [vmem:[%s1236 + $0x171] sm:$0xff]
      %v1366 = vperm.slane %v647, 7
      %v1367 = vmul.f32 %v1334, %v1366
      %v1368 = vmul.f32 %v1335, %v1366
      %v1369 = vmul.f32 %v1336, %v1366
      %v1370 = vmul.f32 %v1337, %v1366
      %v1371 = vmul.f32 %v1338, %v1366
      %v1372 = vmul.f32 %v1339, %v1366
      %v1373 = vmul.f32 %v1340, %v1366
      %v1374 = vmul.f32 %v1341, %v1366
      %v1375 = vmul.f32 %v1342, %v1366
      %v1376 = vmul.f32 %v1343, %v1366
      %v1377 = vmul.f32 %v1344, %v1366
      %v1378 = vmul.f32 %v1345, %v1366
      %v1379 = vmul.f32 %v1346, %v1366
      %v1380 = vmul.f32 %v1347, %v1366
      %v1381 = vmul.f32 %v1348, %v1366
      %v1382 = vmul.f32 %v1349, %v1366
      %v1383 = vmul.f32 %v1350, %v1366
      %v1384 = vmul.f32 %v1351, %v1366
      %v1385 = vmul.f32 %v1352, %v1366
      %v1386 = vmul.f32 %v1353, %v1366
      %v1387 = vmul.f32 %v1354, %v1366
      %v1388 = vmul.f32 %v1355, %v1366
      %v1389 = vmul.f32 %v1356, %v1366
      %v1390 = vmul.f32 %v1357, %v1366
      %v1391 = vmul.f32 %v1358, %v1366
      %v1392 = vmul.f32 %v1359, %v1366
      %v1393 = vmul.f32 %v1360, %v1366
      %v1394 = vmul.f32 %v1361, %v1366
      %v1395 = vmul.f32 %v1362, %v1366
      %v1396 = vmul.f32 %v1363, %v1366
      %v1397 = vmul.f32 %v1364, %v1366
      %v1398 = vmul.f32 %v1365, %v1366
      %v1399 = vadd.f32 %v1302, %v1367
      %v1400 = vadd.f32 %v1303, %v1368
      %v1401 = vadd.f32 %v1304, %v1369
      %v1402 = vadd.f32 %v1305, %v1370
      %v1403 = vadd.f32 %v1306, %v1371
      %v1404 = vadd.f32 %v1307, %v1372
      %v1405 = vadd.f32 %v1308, %v1373
      %v1406 = vadd.f32 %v1309, %v1374
      %v1407 = vadd.f32 %v1310, %v1375
      %v1408 = vadd.f32 %v1311, %v1376
      %v1409 = vadd.f32 %v1312, %v1377
      %v1410 = vadd.f32 %v1313, %v1378
      %v1411 = vadd.f32 %v1314, %v1379
      %v1412 = vadd.f32 %v1315, %v1380
      %v1413 = vadd.f32 %v1316, %v1381
      %v1414 = vadd.f32 %v1317, %v1382
      %v1415 = vadd.f32 %v1318, %v1383
      %v1416 = vadd.f32 %v1319, %v1384
      %v1417 = vadd.f32 %v1320, %v1385
      %v1418 = vadd.f32 %v1321, %v1386
      %v1419 = vadd.f32 %v1322, %v1387
      %v1420 = vadd.f32 %v1323, %v1388
      %v1421 = vadd.f32 %v1324, %v1389
      %v1422 = vadd.f32 %v1325, %v1390
      %v1423 = vadd.f32 %v1326, %v1391
      %v1424 = vadd.f32 %v1327, %v1392
      %v1425 = vadd.f32 %v1328, %v1393
      %v1426 = vadd.f32 %v1329, %v1394
      %v1427 = vadd.f32 %v1330, %v1395
      %v1428 = vadd.f32 %v1331, %v1396
      %v1429 = vadd.f32 %v1332, %v1397
      %v1430 = vadd.f32 %v1333, %v1398
      %v1431 = vld [vmem:[%s1236 + $0x2] sm:$0xff]
      %v1432 = vld [vmem:[%s1236 + $0xa] sm:$0xff]
      %v1433 = vld [vmem:[%s1236 + $0x1a] sm:$0xff]
      %v1434 = vld [vmem:[%s1236 + $0x22] sm:$0xff]
      %v1435 = vld [vmem:[%s1236 + $0x32] sm:$0xff]
      %v1436 = vld [vmem:[%s1236 + $0x3a] sm:$0xff]
      %v1437 = vld [vmem:[%s1236 + $0x4a] sm:$0xff]
      %v1438 = vld [vmem:[%s1236 + $0x52] sm:$0xff]
      %v1439 = vld [vmem:[%s1236 + $0x62] sm:$0xff]
      %v1440 = vld [vmem:[%s1236 + $0x6a] sm:$0xff]
      %v1441 = vld [vmem:[%s1236 + $0x7a] sm:$0xff]
      %v1442 = vld [vmem:[%s1236 + $0x82] sm:$0xff]
      %v1443 = vld [vmem:[%s1236 + $0x92] sm:$0xff]
      %v1444 = vld [vmem:[%s1236 + $0x9a] sm:$0xff]
      %v1445 = vld [vmem:[%s1236 + $0xaa] sm:$0xff]
      %v1446 = vld [vmem:[%s1236 + $0xb2] sm:$0xff]
      %v1447 = vld [vmem:[%s1236 + $0xc2] sm:$0xff]
      %v1448 = vld [vmem:[%s1236 + $0xca] sm:$0xff]
      %v1449 = vld [vmem:[%s1236 + $0xda] sm:$0xff]
      %v1450 = vld [vmem:[%s1236 + $0xe2] sm:$0xff]
      %v1451 = vld [vmem:[%s1236 + $0xf2] sm:$0xff]
      %v1452 = vld [vmem:[%s1236 + $0xfa] sm:$0xff]
      %v1453 = vld [vmem:[%s1236 + $0x10a] sm:$0xff]
      %v1454 = vld [vmem:[%s1236 + $0x112] sm:$0xff]
      %v1455 = vld [vmem:[%s1236 + $0x122] sm:$0xff]
      %v1456 = vld [vmem:[%s1236 + $0x12a] sm:$0xff]
      %v1457 = vld [vmem:[%s1236 + $0x13a] sm:$0xff]
      %v1458 = vld [vmem:[%s1236 + $0x142] sm:$0xff]
      %v1459 = vld [vmem:[%s1236 + $0x152] sm:$0xff]
      %v1460 = vld [vmem:[%s1236 + $0x15a] sm:$0xff]
      %v1461 = vld [vmem:[%s1236 + $0x16a] sm:$0xff]
      %v1462 = vld [vmem:[%s1236 + $0x172] sm:$0xff]
      %v1463 = vperm.slane %v648, 0
      %v1464 = vmul.f32 %v1431, %v1463
      %v1465 = vmul.f32 %v1432, %v1463
      %v1466 = vmul.f32 %v1433, %v1463
      %v1467 = vmul.f32 %v1434, %v1463
      %v1468 = vmul.f32 %v1435, %v1463
      %v1469 = vmul.f32 %v1436, %v1463
      %v1470 = vmul.f32 %v1437, %v1463
      %v1471 = vmul.f32 %v1438, %v1463
      %v1472 = vmul.f32 %v1439, %v1463
      %v1473 = vmul.f32 %v1440, %v1463
      %v1474 = vmul.f32 %v1441, %v1463
      %v1475 = vmul.f32 %v1442, %v1463
      %v1476 = vmul.f32 %v1443, %v1463
      %v1477 = vmul.f32 %v1444, %v1463
      %v1478 = vmul.f32 %v1445, %v1463
      %v1479 = vmul.f32 %v1446, %v1463
      %v1480 = vmul.f32 %v1447, %v1463
      %v1481 = vmul.f32 %v1448, %v1463
      %v1482 = vmul.f32 %v1449, %v1463
      %v1483 = vmul.f32 %v1450, %v1463
      %v1484 = vmul.f32 %v1451, %v1463
      %v1485 = vmul.f32 %v1452, %v1463
      %v1486 = vmul.f32 %v1453, %v1463
      %v1487 = vmul.f32 %v1454, %v1463
      %v1488 = vmul.f32 %v1455, %v1463
      %v1489 = vmul.f32 %v1456, %v1463
      %v1490 = vmul.f32 %v1457, %v1463
      %v1491 = vmul.f32 %v1458, %v1463
      %v1492 = vmul.f32 %v1459, %v1463
      %v1493 = vmul.f32 %v1460, %v1463
      %v1494 = vmul.f32 %v1461, %v1463
      %v1495 = vmul.f32 %v1462, %v1463
      %v1496 = vadd.f32 %v1399, %v1464
      %v1497 = vadd.f32 %v1400, %v1465
      %v1498 = vadd.f32 %v1401, %v1466
      %v1499 = vadd.f32 %v1402, %v1467
      %v1500 = vadd.f32 %v1403, %v1468
      %v1501 = vadd.f32 %v1404, %v1469
      %v1502 = vadd.f32 %v1405, %v1470
      %v1503 = vadd.f32 %v1406, %v1471
      %v1504 = vadd.f32 %v1407, %v1472
      %v1505 = vadd.f32 %v1408, %v1473
      %v1506 = vadd.f32 %v1409, %v1474
      %v1507 = vadd.f32 %v1410, %v1475
      %v1508 = vadd.f32 %v1411, %v1476
      %v1509 = vadd.f32 %v1412, %v1477
      %v1510 = vadd.f32 %v1413, %v1478
      %v1511 = vadd.f32 %v1414, %v1479
      %v1512 = vadd.f32 %v1415, %v1480
      %v1513 = vadd.f32 %v1416, %v1481
      %v1514 = vadd.f32 %v1417, %v1482
      %v1515 = vadd.f32 %v1418, %v1483
      %v1516 = vadd.f32 %v1419, %v1484
      %v1517 = vadd.f32 %v1420, %v1485
      %v1518 = vadd.f32 %v1421, %v1486
      %v1519 = vadd.f32 %v1422, %v1487
      %v1520 = vadd.f32 %v1423, %v1488
      %v1521 = vadd.f32 %v1424, %v1489
      %v1522 = vadd.f32 %v1425, %v1490
      %v1523 = vadd.f32 %v1426, %v1491
      %v1524 = vadd.f32 %v1427, %v1492
      %v1525 = vadd.f32 %v1428, %v1493
      %v1526 = vadd.f32 %v1429, %v1494
      %v1527 = vadd.f32 %v1430, %v1495
      %v1528 = vld [vmem:[%s5] sm:$0xf]
      %v1529 = vld [vmem:[%s6] sm:$0x1]
      %v1531 = vperm.slane %v1529, 0
      %v1534 = vsel %vm279, %v1496, 0
      %v1537 = vsel %vm279, %v1497, 0
      %v1540 = vsel %vm279, %v1498, 0
      %v1543 = vsel %vm279, %v1499, 0
      %v1546 = vsel %vm279, %v1500, 0
      %v1549 = vsel %vm279, %v1501, 0
      %v1552 = vsel %vm279, %v1502, 0
      %v1555 = vsel %vm279, %v1503, 0
      %v1558 = vsel %vm279, %v1504, 0
      %v1561 = vsel %vm279, %v1505, 0
      %v1564 = vsel %vm279, %v1506, 0
      %v1567 = vsel %vm279, %v1507, 0
      %v1570 = vsel %vm279, %v1508, 0
      %v1573 = vsel %vm279, %v1509, 0
      %v1576 = vsel %vm279, %v1510, 0
      %v1579 = vsel %vm279, %v1511, 0
      %v1582 = vsel %vm279, %v1512, 0
      %v1585 = vsel %vm279, %v1513, 0
      %v1588 = vsel %vm279, %v1514, 0
      %v1591 = vsel %vm279, %v1515, 0
      %v1594 = vsel %vm279, %v1516, 0
      %v1597 = vsel %vm279, %v1517, 0
      %v1600 = vsel %vm279, %v1518, 0
      %v1603 = vsel %vm279, %v1519, 0
      %v1606 = vsel %vm279, %v1520, 0
      %v1609 = vsel %vm279, %v1521, 0
      %v1612 = vsel %vm279, %v1522, 0
      %v1615 = vsel %vm279, %v1523, 0
      %v1618 = vsel %vm279, %v1524, 0
      %v1621 = vsel %vm279, %v1525, 0
      %v1624 = vsel %vm279, %v1526, 0
      %v1627 = vsel %vm279, %v1527, 0
      %vm1629 = vcmask 1043456
      %v1631 = vsel %vm1629, %v1528, 0
      %1633 = vmatpush.msra.mxu0 0.0
      %1634 = vmatpush.msra.mxu0 0.0
      %1635 = vmatpush.msra.mxu0 0.0
      %1636 = vmatpush.msra.mxu0 0.0
      %1637 = vmatpush.msra.mxu0 0.0
      %1638 = vmatpush.msra.mxu0 0.0
      %1639 = vmatpush.msra.mxu0 0.0
      %1640 = vmatpush.msra.mxu0 0.0
      %1641 = vmatpush.msra.mxu0 0.0
      %1642 = vmatpush.msra.mxu0 0.0
      %1643 = vmatpush.msra.mxu0 0.0
      %1644 = vmatpush.msra.mxu0 0.0
      %1645 = vmatpush.msra.mxu0 0.0
      %1646 = vmatpush.msra.mxu0 0.0
      %1647 = vmatpush.msra.mxu0 0.0
      %1648 = vmatpush.msra.mxu0 %v1631
      %1649 = vmatmul.f32.gmra.mxu0 %v1534
      %v1650 = vpop.f32.mrf.mxu0
      %v1651 = vadd.f32 %v1531, %v1650
      %1652 = vmatmul.f32.gmra.mxu0 %v1537
      %v1653 = vpop.f32.mrf.mxu0
      %v1654 = vadd.f32 %v1531, %v1653
      %1655 = vmatmul.f32.gmra.mxu0 %v1540
      %v1656 = vpop.f32.mrf.mxu0
      %v1657 = vadd.f32 %v1531, %v1656
      %1658 = vmatmul.f32.gmra.mxu0 %v1543
      %v1659 = vpop.f32.mrf.mxu0
      %v1660 = vadd.f32 %v1531, %v1659
      %1661 = vmatmul.f32.gmra.mxu0 %v1546
      %v1662 = vpop.f32.mrf.mxu0
      %v1663 = vadd.f32 %v1531, %v1662
      %1664 = vmatmul.f32.gmra.mxu0 %v1549
      %v1665 = vpop.f32.mrf.mxu0
      %v1666 = vadd.f32 %v1531, %v1665
      %1667 = vmatmul.f32.gmra.mxu0 %v1552
      %v1668 = vpop.f32.mrf.mxu0
      %v1669 = vadd.f32 %v1531, %v1668
      %1670 = vmatmul.f32.gmra.mxu0 %v1555
      %v1671 = vpop.f32.mrf.mxu0
      %v1672 = vadd.f32 %v1531, %v1671
      %1673 = vmatmul.f32.gmra.mxu0 %v1558
      %v1674 = vpop.f32.mrf.mxu0
      %v1675 = vadd.f32 %v1531, %v1674
      %1676 = vmatmul.f32.gmra.mxu0 %v1561
      %v1677 = vpop.f32.mrf.mxu0
      %v1678 = vadd.f32 %v1531, %v1677
      %1679 = vmatmul.f32.gmra.mxu0 %v1564
      %v1680 = vpop.f32.mrf.mxu0
      %v1681 = vadd.f32 %v1531, %v1680
      %1682 = vmatmul.f32.gmra.mxu0 %v1567
      %v1683 = vpop.f32.mrf.mxu0
      %v1684 = vadd.f32 %v1531, %v1683
      %1685 = vmatmul.f32.gmra.mxu0 %v1570
      %v1686 = vpop.f32.mrf.mxu0
      %v1687 = vadd.f32 %v1531, %v1686
      %1688 = vmatmul.f32.gmra.mxu0 %v1573
      %v1689 = vpop.f32.mrf.mxu0
      %v1690 = vadd.f32 %v1531, %v1689
      %1691 = vmatmul.f32.gmra.mxu0 %v1576
      %v1692 = vpop.f32.mrf.mxu0
      %v1693 = vadd.f32 %v1531, %v1692
      %1694 = vmatmul.f32.gmra.mxu0 %v1579
      %v1695 = vpop.f32.mrf.mxu0
      %v1696 = vadd.f32 %v1531, %v1695
      %1697 = vmatmul.f32.gmra.mxu0 %v1582
      %v1698 = vpop.f32.mrf.mxu0
      %v1699 = vadd.f32 %v1531, %v1698
      %1700 = vmatmul.f32.gmra.mxu0 %v1585
      %v1701 = vpop.f32.mrf.mxu0
      %v1702 = vadd.f32 %v1531, %v1701
      %1703 = vmatmul.f32.gmra.mxu0 %v1588
      %v1704 = vpop.f32.mrf.mxu0
      %v1705 = vadd.f32 %v1531, %v1704
      %1706 = vmatmul.f32.gmra.mxu0 %v1591
      %v1707 = vpop.f32.mrf.mxu0
      %v1708 = vadd.f32 %v1531, %v1707
      %1709 = vmatmul.f32.gmra.mxu0 %v1594
      %v1710 = vpop.f32.mrf.mxu0
      %v1711 = vadd.f32 %v1531, %v1710
      %1712 = vmatmul.f32.gmra.mxu0 %v1597
      %v1713 = vpop.f32.mrf.mxu0
      %v1714 = vadd.f32 %v1531, %v1713
      %1715 = vmatmul.f32.gmra.mxu0 %v1600
      %v1716 = vpop.f32.mrf.mxu0
      %v1717 = vadd.f32 %v1531, %v1716
      %1718 = vmatmul.f32.gmra.mxu0 %v1603
      %v1719 = vpop.f32.mrf.mxu0
      %v1720 = vadd.f32 %v1531, %v1719
      %1721 = vmatmul.f32.gmra.mxu0 %v1606
      %v1722 = vpop.f32.mrf.mxu0
      %v1723 = vadd.f32 %v1531, %v1722
      %1724 = vmatmul.f32.gmra.mxu0 %v1609
      %v1725 = vpop.f32.mrf.mxu0
      %v1726 = vadd.f32 %v1531, %v1725
      %1727 = vmatmul.f32.gmra.mxu0 %v1612
      %v1728 = vpop.f32.mrf.mxu0
      %v1729 = vadd.f32 %v1531, %v1728
      %1730 = vmatmul.f32.gmra.mxu0 %v1615
      %v1731 = vpop.f32.mrf.mxu0
      %v1732 = vadd.f32 %v1531, %v1731
      %1733 = vmatmul.f32.gmra.mxu0 %v1618
      %v1734 = vpop.f32.mrf.mxu0
      %v1735 = vadd.f32 %v1531, %v1734
      %1736 = vmatmul.f32.gmra.mxu0 %v1621
      %v1737 = vpop.f32.mrf.mxu0
      %v1738 = vadd.f32 %v1531, %v1737
      %1739 = vmatmul.f32.gmra.mxu0 %v1624
      %v1740 = vpop.f32.mrf.mxu0
      %v1741 = vadd.f32 %v1531, %v1740
      %1742 = vmatmul.f32.gmra.mxu0 %v1627
      %v1743 = vpop.f32.mrf.mxu0
      %v1744 = vadd.f32 %v1531, %v1743
      %1745 = vdwg.mxu0
      %v1746 = vmax.f32 %v1651, 0.0
      %v1747 = vmax.f32 %v1654, 0.0
      %v1748 = vmax.f32 %v1657, 0.0
      %v1749 = vmax.f32 %v1660, 0.0
      %v1750 = vmax.f32 %v1663, 0.0
      %v1751 = vmax.f32 %v1666, 0.0
      %v1752 = vmax.f32 %v1669, 0.0
      %v1753 = vmax.f32 %v1672, 0.0
      %v1754 = vmax.f32 %v1675, 0.0
      %v1755 = vmax.f32 %v1678, 0.0
      %v1756 = vmax.f32 %v1681, 0.0
      %v1757 = vmax.f32 %v1684, 0.0
      %v1758 = vmax.f32 %v1687, 0.0
      %v1759 = vmax.f32 %v1690, 0.0
      %v1760 = vmax.f32 %v1693, 0.0
      %v1761 = vmax.f32 %v1696, 0.0
      %v1762 = vmax.f32 %v1699, 0.0
      %v1763 = vmax.f32 %v1702, 0.0
      %v1764 = vmax.f32 %v1705, 0.0
      %v1765 = vmax.f32 %v1708, 0.0
      %v1766 = vmax.f32 %v1711, 0.0
      %v1767 = vmax.f32 %v1714, 0.0
      %v1768 = vmax.f32 %v1717, 0.0
      %v1769 = vmax.f32 %v1720, 0.0
      %v1770 = vmax.f32 %v1723, 0.0
      %v1771 = vmax.f32 %v1726, 0.0
      %v1772 = vmax.f32 %v1729, 0.0
      %v1773 = vmax.f32 %v1732, 0.0
      %v1774 = vmax.f32 %v1735, 0.0
      %v1775 = vmax.f32 %v1738, 0.0
      %v1776 = vmax.f32 %v1741, 0.0
      %v1777 = vmax.f32 %v1744, 0.0
      %1778 = vst.msk [vmem:[%s278] sm:$0xff] %vm279, %v1746
      %1779 = vst.msk [vmem:[%s278 + $0x8] sm:$0xff] %vm279, %v1747
      %1780 = vst.msk [vmem:[%s278 + $0x10] sm:$0xff] %vm279, %v1748
      %1781 = vst.msk [vmem:[%s278 + $0x18] sm:$0xff] %vm279, %v1749
      %1782 = vst.msk [vmem:[%s278 + $0x20] sm:$0xff] %vm279, %v1750
      %1783 = vst.msk [vmem:[%s278 + $0x28] sm:$0xff] %vm279, %v1751
      %1784 = vst.msk [vmem:[%s278 + $0x30] sm:$0xff] %vm279, %v1752
      %1785 = vst.msk [vmem:[%s278 + $0x38] sm:$0xff] %vm279, %v1753
      %1786 = vst.msk [vmem:[%s278 + $0x40] sm:$0xff] %vm279, %v1754
      %1787 = vst.msk [vmem:[%s278 + $0x48] sm:$0xff] %vm279, %v1755
      %1788 = vst.msk [vmem:[%s278 + $0x50] sm:$0xff] %vm279, %v1756
      %1789 = vst.msk [vmem:[%s278 + $0x58] sm:$0xff] %vm279, %v1757
      %1790 = vst.msk [vmem:[%s278 + $0x60] sm:$0xff] %vm279, %v1758
      %1791 = vst.msk [vmem:[%s278 + $0x68] sm:$0xff] %vm279, %v1759
      %1792 = vst.msk [vmem:[%s278 + $0x70] sm:$0xff] %vm279, %v1760
      %1793 = vst.msk [vmem:[%s278 + $0x78] sm:$0xff] %vm279, %v1761
      %1794 = vst.msk [vmem:[%s278 + $0x80] sm:$0xff] %vm279, %v1762
      %1795 = vst.msk [vmem:[%s278 + $0x88] sm:$0xff] %vm279, %v1763
      %1796 = vst.msk [vmem:[%s278 + $0x90] sm:$0xff] %vm279, %v1764
      %1797 = vst.msk [vmem:[%s278 + $0x98] sm:$0xff] %vm279, %v1765
      %1798 = vst.msk [vmem:[%s278 + $0xa0] sm:$0xff] %vm279, %v1766
      %1799 = vst.msk [vmem:[%s278 + $0xa8] sm:$0xff] %vm279, %v1767
      %1800 = vst.msk [vmem:[%s278 + $0xb0] sm:$0xff] %vm279, %v1768
      %1801 = vst.msk [vmem:[%s278 + $0xb8] sm:$0xff] %vm279, %v1769
      %1802 = vst.msk [vmem:[%s278 + $0xc0] sm:$0xff] %vm279, %v1770
      %1803 = vst.msk [vmem:[%s278 + $0xc8] sm:$0xff] %vm279, %v1771
      %1804 = vst.msk [vmem:[%s278 + $0xd0] sm:$0xff] %vm279, %v1772
      %1805 = vst.msk [vmem:[%s278 + $0xd8] sm:$0xff] %vm279, %v1773
      %1806 = vst.msk [vmem:[%s278 + $0xe0] sm:$0xff] %vm279, %v1774
      %1807 = vst.msk [vmem:[%s278 + $0xe8] sm:$0xff] %vm279, %v1775
      %1808 = vst.msk [vmem:[%s278 + $0xf0] sm:$0xff] %vm279, %v1776
      %1809 = vst.msk [vmem:[%s278 + $0xf8] sm:$0xff] %vm279, %v1777
      %p1810 = scmp.lt.s32.totalorder %s18, 1
      %s1811 = scalar_select %p1810, %s18, 1
      %s1812 = smul.addr %s1811, 32
      %s1813 = smul.addr %s1812, 8
      %s1814 = scalar_lea.vmem %s7, %s1813
      // Predicated region
      $region49: #{tpu_custom_call.1} parent=47 // pred_check
        %p1815 = pneg %p188
      $region50: #{tpu_custom_call.1} parent=47 // pred_check_branch
        %1817 = sbr.rel (%p1815) target = $region52
      $region51: #{tpu_custom_call.1} parent=47 // pred_region
        _
      $region52: #{tpu_custom_call.1} parent=47 // pred_fallthru
        _
    $region48: #{tpu_custom_call.1} parent=5 // pred_fallthru
      _
    %p1818 = scmp.le.s32.totalorder 2, %s13
    // Predicated region
    $region53: #{tpu_custom_call.1} parent=5 // pred_check
      %p1819 = pneg %p1818
    $region54: #{tpu_custom_call.1} parent=5 // pred_check_branch
      %1821 = sbr.rel (%p1819) target = $region56
    $region55: #{tpu_custom_call.1} parent=5 // pred_region
      %s1822 = ssub.s32 %s13, 2
      // Predicated region
      $region57: #{tpu_custom_call.1} parent=55 // pred_check
        %p1823 = pneg %p194
      $region58: #{tpu_custom_call.1} parent=55 // pred_check_branch
        %1825 = sbr.rel (%p1823) target = $region60
      $region59: #{tpu_custom_call.1} parent=55 // pred_region
        %p1826 = scmp.lt.s32.totalorder %s19, 1
        %s1827 = scalar_select %p1826, %s19, 1
        %s1828 = smul.addr %s1827, 32
        %s1829 = smul.addr %s1828, 8
        %s1830 = scalar_lea.vmem %s7, %s1829
      $region60: #{tpu_custom_call.1} parent=55 // pred_fallthru
        _
    $region56: #{tpu_custom_call.1} parent=5 // pred_fallthru
      _
  $region6: #{tpu_custom_call.1} parent=0 // loop_footer
    %s17 = sadd.s32 1, %s13
  $region7: #{tpu_custom_call.1} parent=0 // loop_footer_branch
    %12 = sbr.rel target = $region3
  $region8: #{tpu_custom_call.1} parent=0 // loop_exit
    _

</llo_original>
